<compile_context>
chip_gen: v5e
topology: v5e:2x2
jax: 0.10.0
libtpu: 0.0.40
codegen_flags: <defaults>
</compile_context>

<pallas_src>
import jax
import jax.numpy as jnp
from jax.experimental import pallas as pl
from jax.experimental.pallas import tpu as pltpu


# ---------------------------------------------------------------------------
# Fused kernel: pre-LN attention block + FFN + to_logit epilogue.
# Grid iterates over batch tiles; weights are broadcast (constant block 0).
# ---------------------------------------------------------------------------
def _decoder_kernel(x_ref, qb_ref, kmeta_ref,
                    ln1_g_ref, ln1_b_ref,
                    wq_ref, bq_ref, wk_ref, bk_ref, wv_ref, bv_ref,
                    wo_ref, bo_ref,
                    ln2_g_ref, ln2_b_ref, w1_ref, b1_ref, w2_ref, b2_ref,
                    w_logit_ref, b_logit_ref,
                    o_ref):
    x = x_ref[...]                                     # (rows, d) f32

    def layer_norm(h, g, b):
        # two-pass variance (avoids E[x^2]-mu^2 cancellation)
        mu = jnp.mean(h, axis=-1, keepdims=True)
        c = h - mu
        var = jnp.mean(c * c, axis=-1, keepdims=True)
        return c * jax.lax.rsqrt(var + 1e-5) * g + b

    # ---- self-attention (single head, pre-LN, residual) -------------------
    h = layer_norm(x, ln1_g_ref[...], ln1_b_ref[...]).astype(jnp.bfloat16)
    # Three separate lane-aligned projections; 1/sqrt(D) is already folded
    # into wq/bq by the wrapper.
    q = jnp.dot(h, wq_ref[...], preferred_element_type=jnp.float32) + bq_ref[...]
    k = jnp.dot(h, wk_ref[...], preferred_element_type=jnp.float32) + bk_ref[...]
    v = jnp.dot(h, wv_ref[...], preferred_element_type=jnp.float32) + bv_ref[...]

    # Batch folded into rows: one (rows, rows) MXU matmul + block-diag mask.
    scores = jax.lax.dot_general(
        q.astype(jnp.bfloat16), k.astype(jnp.bfloat16),
        dimension_numbers=(((1,), (1,)), ((), ())),
        preferred_element_type=jnp.float32)            # (rows, rows)

    # valid[i, j] = (batch of query i == batch of key j) and key j not masked.
    # kmeta holds the key's local batch id, or -1 if the key is masked out.
    valid = qb_ref[...] == kmeta_ref[0]                # (rows,1)==(1,rows)
    scores = jnp.where(valid, scores, -1e9)
    # NOTE: rows whose keys are all masked get a (meaningless) uniform softmax
    #       rather than zeros - standard -1e9 masking caveat.

    m = jnp.max(scores, axis=-1, keepdims=True)
    p = jnp.exp(scores - m)
    p = p * pl.reciprocal(jnp.sum(p, axis=-1, keepdims=True), approx=True)

    attn = jnp.dot(p.astype(jnp.bfloat16), v.astype(jnp.bfloat16),
                   preferred_element_type=jnp.float32)             # (rows, d)
    attn = jnp.dot(attn.astype(jnp.bfloat16), wo_ref[...],
                   preferred_element_type=jnp.float32) + bo_ref[...]
    x1 = x + attn

    # ---- feed-forward (pre-LN, GELU, residual) -----------------------------
    h2 = layer_norm(x1, ln2_g_ref[...], ln2_b_ref[...]).astype(jnp.bfloat16)
    ff = jnp.dot(h2, w1_ref[...], preferred_element_type=jnp.float32) + b1_ref[...]
    # TODO(synk): tanh-approx GELU (PyTorch nn.GELU default is exact erf).
    ff = jax.nn.gelu(ff, approximate=True)
    ff = jnp.dot(ff.astype(jnp.bfloat16), w2_ref[...],
                 preferred_element_type=jnp.float32) + b2_ref[...]
    x2 = x1 + ff

    # ---- fused to_logit epilogue (no HBM round trip of activations) -------
    logits = jnp.dot(x2.astype(jnp.bfloat16), w_logit_ref[...],
                     preferred_element_type=jnp.float32) + b_logit_ref[...]
    o_ref[...] = logits.astype(o_ref.dtype)


_WEIGHT_NAMES = ("ln1_g", "ln1_b",
                 "wq", "bq", "wk", "bk", "wv", "bv", "wo", "bo",
                 "ln2_g", "ln2_b", "w1", "b1", "w2", "b2",
                 "w_logit", "b_logit")


# ---------------------------------------------------------------------------
# Wrapper
# ---------------------------------------------------------------------------
def motion_decoder_forward(x, mask, params, *, batch_tile=None,
                           out_dtype=jnp.float32):
    """x: (b, n, dim) f32; mask: (b, n) bool (True = keep) or None."""
    B, N, D = x.shape
    L = params["w_logit"].shape[1]

    if batch_tile is None:
        # Single grid step by default: v5e/v6e are single-TensorCore chips and
        # at small shapes the kernel is fixed-overhead bound.  Cap folded rows
        # at 256 (one v6e/v7x MXU tile; keeps (rows, rows) scores + FFN
        # intermediate far under v7x's 64 MiB VMEM).
        # TODO(synk): on v7x, split into 2*k "parallel" steps once per-step
        #             work clearly exceeds the ~600-cycle step overhead.
        batch_tile = B
        while batch_tile > 1 and (batch_tile * N > 256 or B % batch_tile):
            batch_tile -= 1
    assert B % batch_tile == 0, (B, batch_tile)
    rows = batch_tile * N
    steps = B // batch_tile
    grid = (steps,)

    if mask is None:
        mask = jnp.ones((B, N), jnp.bool_)

    # Block-diagonal + key-padding mask as two tiny int32 vectors (no f32 bias
    # array in HBM; the in-kernel select is a single VPU compare).
    local_batch = (jnp.arange(rows, dtype=jnp.int32) // N)
    q_batch = local_batch.reshape(rows, 1)                       # (rows, 1)
    keep = mask.astype(jnp.int32).reshape(steps, 1, rows)
    k_meta = jnp.where(keep != 0, local_batch.reshape(1, 1, rows),
                       jnp.int32(-1))                            # (steps,1,rows)

    # Fold the 1/sqrt(D) attention scale into the query projection weights.
    scale = D ** -0.5
    params = dict(params)
    params["wq"] = (params["wq"].astype(jnp.float32) * scale).astype(
        params["wq"].dtype)
    params["bq"] = params["bq"] * scale

    x2d = x.reshape(B * N, D)

    def const_spec(a):
        nd = a.ndim
        return pl.BlockSpec(a.shape, lambda i, _nd=nd: (0,) * _nd)

    weights = [params[nm] for nm in _WEIGHT_NAMES]

    logits2d = pl.pallas_call(
        _decoder_kernel,
        grid=grid,
        in_specs=[
            pl.BlockSpec((rows, D), lambda i: (i, 0)),            # x (folded)
            pl.BlockSpec((rows, 1), lambda i: (0, 0)),            # q batch ids
            pl.BlockSpec((1, 1, rows), lambda i: (i, 0, 0)),      # key meta
        ] + [const_spec(w) for w in weights],
        out_specs=pl.BlockSpec((rows, L), lambda i: (i, 0)),      # lane-dense
        out_shape=jax.ShapeDtypeStruct((B * N, L), out_dtype),
        # No vmem_limit_bytes: live set is well under the default scoped limit
        # (16/32 MiB); requesting 64 MiB would claim all of v7x's VMEM.
        compiler_params=pltpu.CompilerParams(
            dimension_semantics=("parallel",)),
    )(x2d, q_batch, k_meta, *weights)

    return logits2d.reshape(B, N, L)


def init_params(key, dim, logit_dim):
    """Deterministic synthetic parameters (shapes implied by the module)."""
    H = 4 * dim
    ks = jax.random.split(key, 12)
    s = 0.02
    f, bf = jnp.float32, jnp.bfloat16

    def nrm(k, shp):
        return s * jax.random.normal(k, shp, f)

    return {
        "ln1_g": jnp.ones((1, dim), f), "ln1_b": jnp.zeros((1, dim), f),
        # all linears stored pre-transposed (in, out), weights bf16, biases f32
        "wq": nrm(ks[0], (dim, dim)).astype(bf), "bq": nrm(ks[1], (1, dim)),
        "wk": nrm(ks[2], (dim, dim)).astype(bf), "bk": nrm(ks[3], (1, dim)),
        "wv": nrm(ks[4], (dim, dim)).astype(bf), "bv": nrm(ks[5], (1, dim)),
        "wo": nrm(ks[6], (dim, dim)).astype(bf), "bo": nrm(ks[7], (1, dim)),
        "ln2_g": jnp.ones((1, dim), f), "ln2_b": jnp.zeros((1, dim), f),
        "w1": nrm(ks[8], (dim, H)).astype(bf), "b1": jnp.zeros((1, H), f),
        "w2": nrm(ks[9], (H, dim)).astype(bf), "b2": jnp.zeros((1, dim), f),
        # nn.Linear(dim, logit_dim), pre-transposed as (dim, logit_dim)
        "w_logit": nrm(ks[10], (dim, logit_dim)).astype(bf),
        "b_logit": nrm(ks[11], (1, logit_dim)),
    }


if __name__ == "__main__":
    B, N, DIM, LOGIT_DIM = 8, 8, 32, 128   # logit dim chosen lane-dense (x128)

    key = jax.random.PRNGKey(0)
    k_x, k_p = jax.random.split(key)

    x = jax.random.normal(k_x, (B, N, DIM), jnp.float32)           # b n c
    mask = jnp.ones((B, N), jnp.bool_)
    mask = mask.at[1, 6:].set(False).at[5, 3:].set(False)          # True = keep
    params = init_params(k_p, DIM, LOGIT_DIM)

    logits = motion_decoder_forward(x, mask, params)
    jax.block_until_ready(logits)

    assert logits.shape == (B, N, LOGIT_DIM)
    assert logits.dtype == jnp.float32
    print("KERNEL_OK")
</pallas_src>

<mosaic_0001>
module attributes {stable_mosaic.version = 11 : i64} {
  func.func @_decoder_kernel(%arg0: i32, %arg1: memref<64x32xf32, #tpu.memory_space<vmem>>, %arg2: memref<64x1xi32, #tpu.memory_space<vmem>>, %arg3: memref<1x1x64xi32, #tpu.memory_space<vmem>>, %arg4: memref<1x32xf32, #tpu.memory_space<vmem>>, %arg5: memref<1x32xf32, #tpu.memory_space<vmem>>, %arg6: memref<32x32xbf16, #tpu.memory_space<vmem>>, %arg7: memref<1x32xf32, #tpu.memory_space<vmem>>, %arg8: memref<32x32xbf16, #tpu.memory_space<vmem>>, %arg9: memref<1x32xf32, #tpu.memory_space<vmem>>, %arg10: memref<32x32xbf16, #tpu.memory_space<vmem>>, %arg11: memref<1x32xf32, #tpu.memory_space<vmem>>, %arg12: memref<32x32xbf16, #tpu.memory_space<vmem>>, %arg13: memref<1x32xf32, #tpu.memory_space<vmem>>, %arg14: memref<1x32xf32, #tpu.memory_space<vmem>>, %arg15: memref<1x32xf32, #tpu.memory_space<vmem>>, %arg16: memref<32x128xbf16, #tpu.memory_space<vmem>>, %arg17: memref<1x128xf32, #tpu.memory_space<vmem>>, %arg18: memref<128x32xbf16, #tpu.memory_space<vmem>>, %arg19: memref<1x32xf32, #tpu.memory_space<vmem>>, %arg20: memref<32x128xbf16, #tpu.memory_space<vmem>>, %arg21: memref<1x128xf32, #tpu.memory_space<vmem>>, %arg22: memref<64x128xf32, #tpu.memory_space<vmem>>) attributes {dimension_semantics = [#tpu.dimension_semantics<parallel>], iteration_bounds = array<i64: 1>, scalar_prefetch = 0 : i64, scratch_operands = 0 : i64, tpu.core_type = #tpu.core_type<tc>, window_params = [{transform_indices = @transform_0, window_bounds = array<i64: 64, 32>}, {pipeline_mode = #tpu.pipeline_mode<synchronous>, transform_indices = @transform_1, window_bounds = array<i64: 64, 1>}, {transform_indices = @transform_2, window_bounds = array<i64: 1, 1, 64>}, {pipeline_mode = #tpu.pipeline_mode<synchronous>, transform_indices = @transform_3, window_bounds = array<i64: 1, 32>}, {pipeline_mode = #tpu.pipeline_mode<synchronous>, transform_indices = @transform_4, window_bounds = array<i64: 1, 32>}, {pipeline_mode = #tpu.pipeline_mode<synchronous>, transform_indices = @transform_5, window_bounds = array<i64: 32, 32>}, {pipeline_mode = #tpu.pipeline_mode<synchronous>, transform_indices = @transform_6, window_bounds = array<i64: 1, 32>}, {pipeline_mode = #tpu.pipeline_mode<synchronous>, transform_indices = @transform_7, window_bounds = array<i64: 32, 32>}, {pipeline_mode = #tpu.pipeline_mode<synchronous>, transform_indices = @transform_8, window_bounds = array<i64: 1, 32>}, {pipeline_mode = #tpu.pipeline_mode<synchronous>, transform_indices = @transform_9, window_bounds = array<i64: 32, 32>}, {pipeline_mode = #tpu.pipeline_mode<synchronous>, transform_indices = @transform_10, window_bounds = array<i64: 1, 32>}, {pipeline_mode = #tpu.pipeline_mode<synchronous>, transform_indices = @transform_11, window_bounds = array<i64: 32, 32>}, {pipeline_mode = #tpu.pipeline_mode<synchronous>, transform_indices = @transform_12, window_bounds = array<i64: 1, 32>}, {pipeline_mode = #tpu.pipeline_mode<synchronous>, transform_indices = @transform_13, window_bounds = array<i64: 1, 32>}, {pipeline_mode = #tpu.pipeline_mode<synchronous>, transform_indices = @transform_14, window_bounds = array<i64: 1, 32>}, {pipeline_mode = #tpu.pipeline_mode<synchronous>, transform_indices = @transform_15, window_bounds = array<i64: 32, 128>}, {pipeline_mode = #tpu.pipeline_mode<synchronous>, transform_indices = @transform_16, window_bounds = array<i64: 1, 128>}, {pipeline_mode = #tpu.pipeline_mode<synchronous>, transform_indices = @transform_17, window_bounds = array<i64: 128, 32>}, {pipeline_mode = #tpu.pipeline_mode<synchronous>, transform_indices = @transform_18, window_bounds = array<i64: 1, 32>}, {pipeline_mode = #tpu.pipeline_mode<synchronous>, transform_indices = @transform_19, window_bounds = array<i64: 32, 128>}, {pipeline_mode = #tpu.pipeline_mode<synchronous>, transform_indices = @transform_20, window_bounds = array<i64: 1, 128>}, {transform_indices = @transform_21, window_bounds = array<i64: 64, 128>}]} {
    %c0 = arith.constant 0 : index
    %c0_0 = arith.constant 0 : index
    %0 = vector.load %arg1[%c0, %c0_0] : memref<64x32xf32, #tpu.memory_space<vmem>>, vector<64x32xf32>
    %c0_1 = arith.constant 0 : index
    %c0_2 = arith.constant 0 : index
    %1 = vector.load %arg4[%c0_1, %c0_2] : memref<1x32xf32, #tpu.memory_space<vmem>>, vector<1x32xf32>
    %c0_3 = arith.constant 0 : index
    %c0_4 = arith.constant 0 : index
    %2 = vector.load %arg5[%c0_3, %c0_4] : memref<1x32xf32, #tpu.memory_space<vmem>>, vector<1x32xf32>
    %cst = arith.constant dense<0.000000e+00> : vector<64xf32>
    %3 = vector.multi_reduction <add>, %0, %cst [1] : vector<64x32xf32> to vector<64xf32>
    %4 = vector.shape_cast %3 : vector<64xf32> to vector<64x1xf32>
    %cst_5 = arith.constant 3.200000e+01 : f32
    %5 = vector.broadcast %cst_5 : f32 to vector<64x1xf32>
    %6 = arith.divf %4, %5 : vector<64x1xf32>
    %7 = vector.broadcast %6 : vector<64x1xf32> to vector<64x32xf32>
    %8 = arith.subf %0, %7 : vector<64x32xf32>
    %9 = arith.mulf %8, %8 : vector<64x32xf32>
    %cst_6 = arith.constant dense<0.000000e+00> : vector<64xf32>
    %10 = vector.multi_reduction <add>, %9, %cst_6 [1] : vector<64x32xf32> to vector<64xf32>
    %11 = vector.shape_cast %10 : vector<64xf32> to vector<64x1xf32>
    %cst_7 = arith.constant 3.200000e+01 : f32
    %12 = vector.broadcast %cst_7 : f32 to vector<64x1xf32>
    %13 = arith.divf %11, %12 : vector<64x1xf32>
    %cst_8 = arith.constant 9.99999974E-6 : f32
    %14 = vector.broadcast %cst_8 : f32 to vector<64x1xf32>
    %15 = arith.addf %13, %14 : vector<64x1xf32>
    %16 = math.rsqrt %15 : vector<64x1xf32>
    %17 = vector.broadcast %16 : vector<64x1xf32> to vector<64x32xf32>
    %18 = arith.mulf %8, %17 : vector<64x32xf32>
    %19 = vector.broadcast %1 : vector<1x32xf32> to vector<64x32xf32>
    %20 = arith.mulf %18, %19 : vector<64x32xf32>
    %21 = vector.broadcast %2 : vector<1x32xf32> to vector<64x32xf32>
    %22 = arith.addf %20, %21 : vector<64x32xf32>
    %23 = arith.truncf %22 : vector<64x32xf32> to vector<64x32xbf16>
    %c0_9 = arith.constant 0 : index
    %c0_10 = arith.constant 0 : index
    %24 = vector.load %arg6[%c0_9, %c0_10] : memref<32x32xbf16, #tpu.memory_space<vmem>>, vector<32x32xbf16>
    %cst_11 = arith.constant dense<0.000000e+00> : vector<64x32xf32>
    %25 = tpu.matmul %23, %24, %cst_11 {dimension_numbers = #tpu.dot_dimension_numbers<[1], [0], [0], [1], [0, 0, 1, 1], [], []>} : vector<64x32xbf16>, vector<32x32xbf16>, vector<64x32xf32> -> vector<64x32xf32>
    %c0_12 = arith.constant 0 : index
    %c0_13 = arith.constant 0 : index
    %26 = vector.load %arg7[%c0_12, %c0_13] : memref<1x32xf32, #tpu.memory_space<vmem>>, vector<1x32xf32>
    %27 = vector.broadcast %26 : vector<1x32xf32> to vector<64x32xf32>
    %28 = arith.addf %25, %27 : vector<64x32xf32>
    %c0_14 = arith.constant 0 : index
    %c0_15 = arith.constant 0 : index
    %29 = vector.load %arg8[%c0_14, %c0_15] : memref<32x32xbf16, #tpu.memory_space<vmem>>, vector<32x32xbf16>
    %cst_16 = arith.constant dense<0.000000e+00> : vector<64x32xf32>
    %30 = tpu.matmul %23, %29, %cst_16 {dimension_numbers = #tpu.dot_dimension_numbers<[1], [0], [0], [1], [0, 0, 1, 1], [], []>} : vector<64x32xbf16>, vector<32x32xbf16>, vector<64x32xf32> -> vector<64x32xf32>
    %c0_17 = arith.constant 0 : index
    %c0_18 = arith.constant 0 : index
    %31 = vector.load %arg9[%c0_17, %c0_18] : memref<1x32xf32, #tpu.memory_space<vmem>>, vector<1x32xf32>
    %32 = vector.broadcast %31 : vector<1x32xf32> to vector<64x32xf32>
    %33 = arith.addf %30, %32 : vector<64x32xf32>
    %c0_19 = arith.constant 0 : index
    %c0_20 = arith.constant 0 : index
    %34 = vector.load %arg10[%c0_19, %c0_20] : memref<32x32xbf16, #tpu.memory_space<vmem>>, vector<32x32xbf16>
    %cst_21 = arith.constant dense<0.000000e+00> : vector<64x32xf32>
    %35 = tpu.matmul %23, %34, %cst_21 {dimension_numbers = #tpu.dot_dimension_numbers<[1], [0], [0], [1], [0, 0, 1, 1], [], []>} : vector<64x32xbf16>, vector<32x32xbf16>, vector<64x32xf32> -> vector<64x32xf32>
    %c0_22 = arith.constant 0 : index
    %c0_23 = arith.constant 0 : index
    %36 = vector.load %arg11[%c0_22, %c0_23] : memref<1x32xf32, #tpu.memory_space<vmem>>, vector<1x32xf32>
    %37 = vector.broadcast %36 : vector<1x32xf32> to vector<64x32xf32>
    %38 = arith.addf %35, %37 : vector<64x32xf32>
    %39 = arith.truncf %28 : vector<64x32xf32> to vector<64x32xbf16>
    %40 = arith.truncf %33 : vector<64x32xf32> to vector<64x32xbf16>
    %cst_24 = arith.constant dense<0.000000e+00> : vector<64x64xf32>
    %41 = tpu.matmul %39, %40, %cst_24 {dimension_numbers = #tpu.dot_dimension_numbers<[1], [1], [0], [0], [0, 0, 1, 0], [], []>} : vector<64x32xbf16>, vector<64x32xbf16>, vector<64x64xf32> -> vector<64x64xf32>
    %c0_25 = arith.constant 0 : index
    %c0_26 = arith.constant 0 : index
    %42 = vector.load %arg2[%c0_25, %c0_26] : memref<64x1xi32, #tpu.memory_space<vmem>>, vector<64x1xi32>
    %c0_27 = arith.constant 0 : index
    %c0_28 = arith.constant 0 : index
    %c0_29 = arith.constant 0 : index
    %43 = vector.load %arg3[%c0_27, %c0_28, %c0_29] : memref<1x1x64xi32, #tpu.memory_space<vmem>>, vector<1x1x64xi32>
    %44 = vector.shape_cast %43 : vector<1x1x64xi32> to vector<1x64xi32>
    %45 = vector.broadcast %42 : vector<64x1xi32> to vector<64x64xi32>
    %46 = vector.broadcast %44 : vector<1x64xi32> to vector<64x64xi32>
    %47 = arith.cmpi eq, %45, %46 : vector<64x64xi32>
    %cst_30 = arith.constant -1.000000e+09 : f32
    %48 = vector.broadcast %cst_30 : f32 to vector<64x64xf32>
    %49 = arith.select %47, %41, %48 : vector<64x64xi1>, vector<64x64xf32>
    %cst_31 = arith.constant dense<0xFF800000> : vector<64xf32>
    %50 = vector.multi_reduction <maximumf>, %49, %cst_31 [1] : vector<64x64xf32> to vector<64xf32>
    %51 = vector.shape_cast %50 : vector<64xf32> to vector<64x1xf32>
    %52 = vector.broadcast %51 : vector<64x1xf32> to vector<64x64xf32>
    %53 = arith.subf %49, %52 : vector<64x64xf32>
    %54 = math.exp %53 : vector<64x64xf32>
    %cst_32 = arith.constant dense<0.000000e+00> : vector<64xf32>
    %55 = vector.multi_reduction <add>, %54, %cst_32 [1] : vector<64x64xf32> to vector<64xf32>
    %56 = vector.shape_cast %55 : vector<64xf32> to vector<64x1xf32>
    %57 = tpu.reciprocal %56 {approx = true} : vector<64x1xf32> -> vector<64x1xf32>
    %58 = vector.broadcast %57 : vector<64x1xf32> to vector<64x64xf32>
    %59 = arith.mulf %54, %58 : vector<64x64xf32>
    %60 = arith.truncf %59 : vector<64x64xf32> to vector<64x64xbf16>
    %61 = arith.truncf %38 : vector<64x32xf32> to vector<64x32xbf16>
    %cst_33 = arith.constant dense<0.000000e+00> : vector<64x32xf32>
    %62 = tpu.matmul %60, %61, %cst_33 {dimension_numbers = #tpu.dot_dimension_numbers<[1], [0], [0], [1], [0, 0, 1, 1], [], []>} : vector<64x64xbf16>, vector<64x32xbf16>, vector<64x32xf32> -> vector<64x32xf32>
    %63 = arith.truncf %62 : vector<64x32xf32> to vector<64x32xbf16>
    %c0_34 = arith.constant 0 : index
    %c0_35 = arith.constant 0 : index
    %64 = vector.load %arg12[%c0_34, %c0_35] : memref<32x32xbf16, #tpu.memory_space<vmem>>, vector<32x32xbf16>
    %cst_36 = arith.constant dense<0.000000e+00> : vector<64x32xf32>
    %65 = tpu.matmul %63, %64, %cst_36 {dimension_numbers = #tpu.dot_dimension_numbers<[1], [0], [0], [1], [0, 0, 1, 1], [], []>} : vector<64x32xbf16>, vector<32x32xbf16>, vector<64x32xf32> -> vector<64x32xf32>
    %c0_37 = arith.constant 0 : index
    %c0_38 = arith.constant 0 : index
    %66 = vector.load %arg13[%c0_37, %c0_38] : memref<1x32xf32, #tpu.memory_space<vmem>>, vector<1x32xf32>
    %67 = vector.broadcast %66 : vector<1x32xf32> to vector<64x32xf32>
    %68 = arith.addf %65, %67 : vector<64x32xf32>
    %69 = arith.addf %0, %68 : vector<64x32xf32>
    %c0_39 = arith.constant 0 : index
    %c0_40 = arith.constant 0 : index
    %70 = vector.load %arg14[%c0_39, %c0_40] : memref<1x32xf32, #tpu.memory_space<vmem>>, vector<1x32xf32>
    %c0_41 = arith.constant 0 : index
    %c0_42 = arith.constant 0 : index
    %71 = vector.load %arg15[%c0_41, %c0_42] : memref<1x32xf32, #tpu.memory_space<vmem>>, vector<1x32xf32>
    %cst_43 = arith.constant dense<0.000000e+00> : vector<64xf32>
    %72 = vector.multi_reduction <add>, %69, %cst_43 [1] : vector<64x32xf32> to vector<64xf32>
    %73 = vector.shape_cast %72 : vector<64xf32> to vector<64x1xf32>
    %cst_44 = arith.constant 3.200000e+01 : f32
    %74 = vector.broadcast %cst_44 : f32 to vector<64x1xf32>
    %75 = arith.divf %73, %74 : vector<64x1xf32>
    %76 = vector.broadcast %75 : vector<64x1xf32> to vector<64x32xf32>
    %77 = arith.subf %69, %76 : vector<64x32xf32>
    %78 = arith.mulf %77, %77 : vector<64x32xf32>
    %cst_45 = arith.constant dense<0.000000e+00> : vector<64xf32>
    %79 = vector.multi_reduction <add>, %78, %cst_45 [1] : vector<64x32xf32> to vector<64xf32>
    %80 = vector.shape_cast %79 : vector<64xf32> to vector<64x1xf32>
    %cst_46 = arith.constant 3.200000e+01 : f32
    %81 = vector.broadcast %cst_46 : f32 to vector<64x1xf32>
    %82 = arith.divf %80, %81 : vector<64x1xf32>
    %cst_47 = arith.constant 9.99999974E-6 : f32
    %83 = vector.broadcast %cst_47 : f32 to vector<64x1xf32>
    %84 = arith.addf %82, %83 : vector<64x1xf32>
    %85 = math.rsqrt %84 : vector<64x1xf32>
    %86 = vector.broadcast %85 : vector<64x1xf32> to vector<64x32xf32>
    %87 = arith.mulf %77, %86 : vector<64x32xf32>
    %88 = vector.broadcast %70 : vector<1x32xf32> to vector<64x32xf32>
    %89 = arith.mulf %87, %88 : vector<64x32xf32>
    %90 = vector.broadcast %71 : vector<1x32xf32> to vector<64x32xf32>
    %91 = arith.addf %89, %90 : vector<64x32xf32>
    %92 = arith.truncf %91 : vector<64x32xf32> to vector<64x32xbf16>
    %c0_48 = arith.constant 0 : index
    %c0_49 = arith.constant 0 : index
    %93 = vector.load %arg16[%c0_48, %c0_49] : memref<32x128xbf16, #tpu.memory_space<vmem>>, vector<32x128xbf16>
    %cst_50 = arith.constant dense<0.000000e+00> : vector<64x128xf32>
    %94 = tpu.matmul %92, %93, %cst_50 {dimension_numbers = #tpu.dot_dimension_numbers<[1], [0], [0], [1], [0, 0, 1, 1], [], []>} : vector<64x32xbf16>, vector<32x128xbf16>, vector<64x128xf32> -> vector<64x128xf32>
    %c0_51 = arith.constant 0 : index
    %c0_52 = arith.constant 0 : index
    %95 = vector.load %arg17[%c0_51, %c0_52] : memref<1x128xf32, #tpu.memory_space<vmem>>, vector<1x128xf32>
    %96 = vector.broadcast %95 : vector<1x128xf32> to vector<64x128xf32>
    %97 = arith.addf %94, %96 : vector<64x128xf32>
    %98 = arith.mulf %97, %97 : vector<64x128xf32>
    %99 = arith.mulf %97, %98 : vector<64x128xf32>
    %cst_53 = arith.constant 4.471500e-02 : f32
    %100 = vector.broadcast %cst_53 : f32 to vector<64x128xf32>
    %101 = arith.mulf %100, %99 : vector<64x128xf32>
    %102 = arith.addf %97, %101 : vector<64x128xf32>
    %cst_54 = arith.constant 0.797884583 : f32
    %103 = vector.broadcast %cst_54 : f32 to vector<64x128xf32>
    %104 = arith.mulf %103, %102 : vector<64x128xf32>
    %105 = math.tanh %104 : vector<64x128xf32>
    %cst_55 = arith.constant 1.000000e+00 : f32
    %106 = vector.broadcast %cst_55 : f32 to vector<64x128xf32>
    %107 = arith.addf %106, %105 : vector<64x128xf32>
    %cst_56 = arith.constant 5.000000e-01 : f32
    %108 = vector.broadcast %cst_56 : f32 to vector<64x128xf32>
    %109 = arith.mulf %108, %107 : vector<64x128xf32>
    %110 = arith.mulf %97, %109 : vector<64x128xf32>
    %111 = arith.truncf %110 : vector<64x128xf32> to vector<64x128xbf16>
    %c0_57 = arith.constant 0 : index
    %c0_58 = arith.constant 0 : index
    %112 = vector.load %arg18[%c0_57, %c0_58] : memref<128x32xbf16, #tpu.memory_space<vmem>>, vector<128x32xbf16>
    %cst_59 = arith.constant dense<0.000000e+00> : vector<64x32xf32>
    %113 = tpu.matmul %111, %112, %cst_59 {dimension_numbers = #tpu.dot_dimension_numbers<[1], [0], [0], [1], [0, 0, 1, 1], [], []>} : vector<64x128xbf16>, vector<128x32xbf16>, vector<64x32xf32> -> vector<64x32xf32>
    %c0_60 = arith.constant 0 : index
    %c0_61 = arith.constant 0 : index
    %114 = vector.load %arg19[%c0_60, %c0_61] : memref<1x32xf32, #tpu.memory_space<vmem>>, vector<1x32xf32>
    %115 = vector.broadcast %114 : vector<1x32xf32> to vector<64x32xf32>
    %116 = arith.addf %113, %115 : vector<64x32xf32>
    %117 = arith.addf %69, %116 : vector<64x32xf32>
    %118 = arith.truncf %117 : vector<64x32xf32> to vector<64x32xbf16>
    %c0_62 = arith.constant 0 : index
    %c0_63 = arith.constant 0 : index
    %119 = vector.load %arg20[%c0_62, %c0_63] : memref<32x128xbf16, #tpu.memory_space<vmem>>, vector<32x128xbf16>
    %cst_64 = arith.constant dense<0.000000e+00> : vector<64x128xf32>
    %120 = tpu.matmul %118, %119, %cst_64 {dimension_numbers = #tpu.dot_dimension_numbers<[1], [0], [0], [1], [0, 0, 1, 1], [], []>} : vector<64x32xbf16>, vector<32x128xbf16>, vector<64x128xf32> -> vector<64x128xf32>
    %c0_65 = arith.constant 0 : index
    %c0_66 = arith.constant 0 : index
    %121 = vector.load %arg21[%c0_65, %c0_66] : memref<1x128xf32, #tpu.memory_space<vmem>>, vector<1x128xf32>
    %122 = vector.broadcast %121 : vector<1x128xf32> to vector<64x128xf32>
    %123 = arith.addf %120, %122 : vector<64x128xf32>
    %c0_67 = arith.constant 0 : index
    %c0_68 = arith.constant 0 : index
    %124 = vector.load %arg22[%c0_67, %c0_68] : memref<64x128xf32, #tpu.memory_space<vmem>>, vector<64x128xf32>
    tpu.vector_store %arg22[%c0_67, %c0_68], %123 {strides = array<i32>} : memref<64x128xf32, #tpu.memory_space<vmem>>, vector<64x128xf32>,
    return
  }
  func.func @transform_0(%arg0: i32) -> (i32, i32) {
    %c0_i32 = arith.constant 0 : i32
    %c0_i32_0 = arith.constant 0 : i32
    return %arg0, %c0_i32 : i32, i32
  }
  func.func @transform_1(%arg0: i32) -> (i32, i32) {
    %c0_i32 = arith.constant 0 : i32
    %c0_i32_0 = arith.constant 0 : i32
    %c0_i32_1 = arith.constant 0 : i32
    return %c0_i32, %c0_i32_0 : i32, i32
  }
  func.func @transform_2(%arg0: i32) -> (i32, i32, i32) {
    %c0_i32 = arith.constant 0 : i32
    %c0_i32_0 = arith.constant 0 : i32
    %c0_i32_1 = arith.constant 0 : i32
    return %arg0, %c0_i32, %c0_i32_0 : i32, i32, i32
  }
  func.func @transform_3(%arg0: i32) -> (i32, i32) {
    %c0_i32 = arith.constant 0 : i32
    %c0_i32_0 = arith.constant 0 : i32
    %c0_i32_1 = arith.constant 0 : i32
    return %c0_i32, %c0_i32_0 : i32, i32
  }
  func.func @transform_4(%arg0: i32) -> (i32, i32) {
    %c0_i32 = arith.constant 0 : i32
    %c0_i32_0 = arith.constant 0 : i32
    %c0_i32_1 = arith.constant 0 : i32
    return %c0_i32, %c0_i32_0 : i32, i32
  }
  func.func @transform_5(%arg0: i32) -> (i32, i32) {
    %c0_i32 = arith.constant 0 : i32
    %c0_i32_0 = arith.constant 0 : i32
    %c0_i32_1 = arith.constant 0 : i32
    return %c0_i32, %c0_i32_0 : i32, i32
  }
  func.func @transform_6(%arg0: i32) -> (i32, i32) {
    %c0_i32 = arith.constant 0 : i32
    %c0_i32_0 = arith.constant 0 : i32
    %c0_i32_1 = arith.constant 0 : i32
    return %c0_i32, %c0_i32_0 : i32, i32
  }
  func.func @transform_7(%arg0: i32) -> (i32, i32) {
    %c0_i32 = arith.constant 0 : i32
    %c0_i32_0 = arith.constant 0 : i32
    %c0_i32_1 = arith.constant 0 : i32
    return %c0_i32, %c0_i32_0 : i32, i32
  }
  func.func @transform_8(%arg0: i32) -> (i32, i32) {
    %c0_i32 = arith.constant 0 : i32
    %c0_i32_0 = arith.constant 0 : i32
    %c0_i32_1 = arith.constant 0 : i32
    return %c0_i32, %c0_i32_0 : i32, i32
  }
  func.func @transform_9(%arg0: i32) -> (i32, i32) {
    %c0_i32 = arith.constant 0 : i32
    %c0_i32_0 = arith.constant 0 : i32
    %c0_i32_1 = arith.constant 0 : i32
    return %c0_i32, %c0_i32_0 : i32, i32
  }
  func.func @transform_10(%arg0: i32) -> (i32, i32) {
    %c0_i32 = arith.constant 0 : i32
    %c0_i32_0 = arith.constant 0 : i32
    %c0_i32_1 = arith.constant 0 : i32
    return %c0_i32, %c0_i32_0 : i32, i32
  }
  func.func @transform_11(%arg0: i32) -> (i32, i32) {
    %c0_i32 = arith.constant 0 : i32
    %c0_i32_0 = arith.constant 0 : i32
    %c0_i32_1 = arith.constant 0 : i32
    return %c0_i32, %c0_i32_0 : i32, i32
  }
  func.func @transform_12(%arg0: i32) -> (i32, i32) {
    %c0_i32 = arith.constant 0 : i32
    %c0_i32_0 = arith.constant 0 : i32
    %c0_i32_1 = arith.constant 0 : i32
    return %c0_i32, %c0_i32_0 : i32, i32
  }
  func.func @transform_13(%arg0: i32) -> (i32, i32) {
    %c0_i32 = arith.constant 0 : i32
    %c0_i32_0 = arith.constant 0 : i32
    %c0_i32_1 = arith.constant 0 : i32
    return %c0_i32, %c0_i32_0 : i32, i32
  }
  func.func @transform_14(%arg0: i32) -> (i32, i32) {
    %c0_i32 = arith.constant 0 : i32
    %c0_i32_0 = arith.constant 0 : i32
    %c0_i32_1 = arith.constant 0 : i32
    return %c0_i32, %c0_i32_0 : i32, i32
  }
  func.func @transform_15(%arg0: i32) -> (i32, i32) {
    %c0_i32 = arith.constant 0 : i32
    %c0_i32_0 = arith.constant 0 : i32
    %c0_i32_1 = arith.constant 0 : i32
    return %c0_i32, %c0_i32_0 : i32, i32
  }
  func.func @transform_16(%arg0: i32) -> (i32, i32) {
    %c0_i32 = arith.constant 0 : i32
    %c0_i32_0 = arith.constant 0 : i32
    %c0_i32_1 = arith.constant 0 : i32
    return %c0_i32, %c0_i32_0 : i32, i32
  }
  func.func @transform_17(%arg0: i32) -> (i32, i32) {
    %c0_i32 = arith.constant 0 : i32
    %c0_i32_0 = arith.constant 0 : i32
    %c0_i32_1 = arith.constant 0 : i32
    return %c0_i32, %c0_i32_0 : i32, i32
  }
  func.func @transform_18(%arg0: i32) -> (i32, i32) {
    %c0_i32 = arith.constant 0 : i32
    %c0_i32_0 = arith.constant 0 : i32
    %c0_i32_1 = arith.constant 0 : i32
    return %c0_i32, %c0_i32_0 : i32, i32
  }
  func.func @transform_19(%arg0: i32) -> (i32, i32) {
    %c0_i32 = arith.constant 0 : i32
    %c0_i32_0 = arith.constant 0 : i32
    %c0_i32_1 = arith.constant 0 : i32
    return %c0_i32, %c0_i32_0 : i32, i32
  }
  func.func @transform_20(%arg0: i32) -> (i32, i32) {
    %c0_i32 = arith.constant 0 : i32
    %c0_i32_0 = arith.constant 0 : i32
    %c0_i32_1 = arith.constant 0 : i32
    return %c0_i32, %c0_i32_0 : i32, i32
  }
  func.func @transform_21(%arg0: i32) -> (i32, i32) {
    %c0_i32 = arith.constant 0 : i32
    %c0_i32_0 = arith.constant 0 : i32
    return %arg0, %c0_i32 : i32, i32
  }
}

</mosaic_0001>

<llo_original>
// kernel: tpu_custom_call.1
$region0: #{tpu_custom_call.1}
  #allocation0 [shape = 'u32[]', space=smem, size = 0x4, offset = 0x4, fixed_abs, tag = 'smem constant byte address 0x4 - core index']
  #allocation1 [shape = 'u32[72,128]{1,0:T(1,128)}', space=vmem, size = 0x9000, scoped, tag = 'internal scratch']
  %s0 = inlined_call_operand.vmem [shape: f32[64,32], index: 0, kind: input, shape index: {}]
  %s1 = inlined_call_operand.vmem [shape: s32[64,1], index: 1, kind: input, shape index: {}]
  %s2 = inlined_call_operand.vmem [shape: s32[1,1,64], index: 2, kind: input, shape index: {}]
  %s3 = inlined_call_operand.vmem [shape: f32[1,32], index: 3, kind: input, shape index: {}]
  %s4 = inlined_call_operand.vmem [shape: f32[1,32], index: 4, kind: input, shape index: {}]
  %s5 = inlined_call_operand.vmem [shape: bf16[32,32], index: 5, kind: input, shape index: {}]
  %s6 = inlined_call_operand.vmem [shape: f32[1,32], index: 6, kind: input, shape index: {}]
  %s7 = inlined_call_operand.vmem [shape: bf16[32,32], index: 7, kind: input, shape index: {}]
  %s8 = inlined_call_operand.vmem [shape: f32[1,32], index: 8, kind: input, shape index: {}]
  %s9 = inlined_call_operand.vmem [shape: bf16[32,32], index: 9, kind: input, shape index: {}]
  %s10 = inlined_call_operand.vmem [shape: f32[1,32], index: 10, kind: input, shape index: {}]
  %s11 = inlined_call_operand.vmem [shape: bf16[32,32], index: 11, kind: input, shape index: {}]
  %s12 = inlined_call_operand.vmem [shape: f32[1,32], index: 12, kind: input, shape index: {}]
  %s13 = inlined_call_operand.vmem [shape: f32[1,32], index: 13, kind: input, shape index: {}]
  %s14 = inlined_call_operand.vmem [shape: f32[1,32], index: 14, kind: input, shape index: {}]
  %s15 = inlined_call_operand.vmem [shape: bf16[32,128], index: 15, kind: input, shape index: {}]
  %s16 = inlined_call_operand.vmem [shape: f32[1,128], index: 16, kind: input, shape index: {}]
  %s17 = inlined_call_operand.vmem [shape: bf16[128,32], index: 17, kind: input, shape index: {}]
  %s18 = inlined_call_operand.vmem [shape: f32[1,32], index: 18, kind: input, shape index: {}]
  %s19 = inlined_call_operand.vmem [shape: bf16[32,128], index: 19, kind: input, shape index: {}]
  %s20 = inlined_call_operand.vmem [shape: f32[1,128], index: 20, kind: input, shape index: {}]
  %s21 = inlined_call_operand.hbm [shape: f32[64,128], index: 21, kind: output, shape index: {}]
  %s22 = sld [smem:[#allocation0]]
  $region94: #{tpu_custom_call.1} parent=0
    _
  %s24 = ssub.s32 1, %s22
  %s25 = scalar_select 0, %s24, %s22
  $region1: #{tpu_custom_call.1} parent=0
    #allocation2 [shape = 'u8[32768]{0}', space=vmem, size = 0x8000, scoped, tag = 'output window, operand 0, single buffered']
    #allocation3 [shape = 's32[1]{0}', space=sflag, size = 0x4, scoped, tag = 'scoped memory for tpu_custom_call.1']
    %26 = vsyncpa [#allocation3], 0
    // Predicated region
    $region2: #{tpu_custom_call.1} parent=1 // pred_check
      _
    $region3: #{tpu_custom_call.1} parent=1 // pred_check_branch
      %28 = sbr.rel (0) target = $region5
    $region4: #{tpu_custom_call.1} parent=1 // pred_region
      _
    $region5: #{tpu_custom_call.1} parent=1 // pred_fallthru
      _
    // Predicated region
    $region6: #{tpu_custom_call.1} parent=1 // pred_check
      _
    $region7: #{tpu_custom_call.1} parent=1 // pred_check_branch
      %30 = sbr.rel (0) target = $region9
    $region8: #{tpu_custom_call.1} parent=1 // pred_region
      _
    $region9: #{tpu_custom_call.1} parent=1 // pred_fallthru
      _
    // Predicated region
    $region10: #{tpu_custom_call.1} parent=1 // pred_check
      _
    $region11: #{tpu_custom_call.1} parent=1 // pred_check_branch
      %32 = sbr.rel (0) target = $region13
    $region12: #{tpu_custom_call.1} parent=1 // pred_region
      _
    $region13: #{tpu_custom_call.1} parent=1 // pred_fallthru
      _
    // Predicated region
    $region14: #{tpu_custom_call.1} parent=1 // pred_check
      _
    $region15: #{tpu_custom_call.1} parent=1 // pred_check_branch
      %34 = sbr.rel (0) target = $region17
    $region16: #{tpu_custom_call.1} parent=1 // pred_region
      _
    $region17: #{tpu_custom_call.1} parent=1 // pred_fallthru
      _
    // Predicated region
    $region18: #{tpu_custom_call.1} parent=1 // pred_check
      _
    $region19: #{tpu_custom_call.1} parent=1 // pred_check_branch
      %36 = sbr.rel (0) target = $region21
    $region20: #{tpu_custom_call.1} parent=1 // pred_region
      _
    $region21: #{tpu_custom_call.1} parent=1 // pred_fallthru
      _
    // Predicated region
    $region22: #{tpu_custom_call.1} parent=1 // pred_check
      _
    $region23: #{tpu_custom_call.1} parent=1 // pred_check_branch
      %38 = sbr.rel (0) target = $region25
    $region24: #{tpu_custom_call.1} parent=1 // pred_region
      _
    $region25: #{tpu_custom_call.1} parent=1 // pred_fallthru
      _
    // Predicated region
    $region26: #{tpu_custom_call.1} parent=1 // pred_check
      _
    $region27: #{tpu_custom_call.1} parent=1 // pred_check_branch
      %40 = sbr.rel (0) target = $region29
    $region28: #{tpu_custom_call.1} parent=1 // pred_region
      _
    $region29: #{tpu_custom_call.1} parent=1 // pred_fallthru
      _
    // Predicated region
    $region30: #{tpu_custom_call.1} parent=1 // pred_check
      _
    $region31: #{tpu_custom_call.1} parent=1 // pred_check_branch
      %42 = sbr.rel (0) target = $region33
    $region32: #{tpu_custom_call.1} parent=1 // pred_region
      _
    $region33: #{tpu_custom_call.1} parent=1 // pred_fallthru
      _
    // Predicated region
    $region34: #{tpu_custom_call.1} parent=1 // pred_check
      _
    $region35: #{tpu_custom_call.1} parent=1 // pred_check_branch
      %44 = sbr.rel (0) target = $region37
    $region36: #{tpu_custom_call.1} parent=1 // pred_region
      _
    $region37: #{tpu_custom_call.1} parent=1 // pred_fallthru
      _
    // Predicated region
    $region38: #{tpu_custom_call.1} parent=1 // pred_check
      _
    $region39: #{tpu_custom_call.1} parent=1 // pred_check_branch
      %46 = sbr.rel (0) target = $region41
    $region40: #{tpu_custom_call.1} parent=1 // pred_region
      _
    $region41: #{tpu_custom_call.1} parent=1 // pred_fallthru
      _
    // Predicated region
    $region42: #{tpu_custom_call.1} parent=1 // pred_check
      _
    $region43: #{tpu_custom_call.1} parent=1 // pred_check_branch
      %48 = sbr.rel (0) target = $region45
    $region44: #{tpu_custom_call.1} parent=1 // pred_region
      _
    $region45: #{tpu_custom_call.1} parent=1 // pred_fallthru
      _
    // Predicated region
    $region46: #{tpu_custom_call.1} parent=1 // pred_check
      _
    $region47: #{tpu_custom_call.1} parent=1 // pred_check_branch
      %50 = sbr.rel (0) target = $region49
    $region48: #{tpu_custom_call.1} parent=1 // pred_region
      _
    $region49: #{tpu_custom_call.1} parent=1 // pred_fallthru
      _
    // Predicated region
    $region50: #{tpu_custom_call.1} parent=1 // pred_check
      _
    $region51: #{tpu_custom_call.1} parent=1 // pred_check_branch
      %52 = sbr.rel (0) target = $region53
    $region52: #{tpu_custom_call.1} parent=1 // pred_region
      _
    $region53: #{tpu_custom_call.1} parent=1 // pred_fallthru
      _
    // Predicated region
    $region54: #{tpu_custom_call.1} parent=1 // pred_check
      _
    $region55: #{tpu_custom_call.1} parent=1 // pred_check_branch
      %54 = sbr.rel (0) target = $region57
    $region56: #{tpu_custom_call.1} parent=1 // pred_region
      _
    $region57: #{tpu_custom_call.1} parent=1 // pred_fallthru
      _
    // Predicated region
    $region58: #{tpu_custom_call.1} parent=1 // pred_check
      _
    $region59: #{tpu_custom_call.1} parent=1 // pred_check_branch
      %56 = sbr.rel (0) target = $region61
    $region60: #{tpu_custom_call.1} parent=1 // pred_region
      _
    $region61: #{tpu_custom_call.1} parent=1 // pred_fallthru
      _
    // Predicated region
    $region62: #{tpu_custom_call.1} parent=1 // pred_check
      _
    $region63: #{tpu_custom_call.1} parent=1 // pred_check_branch
      %58 = sbr.rel (0) target = $region65
    $region64: #{tpu_custom_call.1} parent=1 // pred_region
      _
    $region65: #{tpu_custom_call.1} parent=1 // pred_fallthru
      _
    // Predicated region
    $region66: #{tpu_custom_call.1} parent=1 // pred_check
      _
    $region67: #{tpu_custom_call.1} parent=1 // pred_check_branch
      %60 = sbr.rel (0) target = $region69
    $region68: #{tpu_custom_call.1} parent=1 // pred_region
      _
    $region69: #{tpu_custom_call.1} parent=1 // pred_fallthru
      _
    // Predicated region
    $region70: #{tpu_custom_call.1} parent=1 // pred_check
      _
    $region71: #{tpu_custom_call.1} parent=1 // pred_check_branch
      %62 = sbr.rel (0) target = $region73
    $region72: #{tpu_custom_call.1} parent=1 // pred_region
      _
    $region73: #{tpu_custom_call.1} parent=1 // pred_fallthru
      _
    // Predicated region
    $region74: #{tpu_custom_call.1} parent=1 // pred_check
      _
    $region75: #{tpu_custom_call.1} parent=1 // pred_check_branch
      %64 = sbr.rel (0) target = $region77
    $region76: #{tpu_custom_call.1} parent=1 // pred_region
      _
    $region77: #{tpu_custom_call.1} parent=1 // pred_fallthru
      _
    // Predicated region
    $region78: #{tpu_custom_call.1} parent=1 // pred_check
      _
    $region79: #{tpu_custom_call.1} parent=1 // pred_check_branch
      %66 = sbr.rel (0) target = $region81
    $region80: #{tpu_custom_call.1} parent=1 // pred_region
      _
    $region81: #{tpu_custom_call.1} parent=1 // pred_fallthru
      _
    // Predicated region
    $region82: #{tpu_custom_call.1} parent=1 // pred_check
      _
    $region83: #{tpu_custom_call.1} parent=1 // pred_check_branch
      %68 = sbr.rel (0) target = $region85
    $region84: #{tpu_custom_call.1} parent=1 // pred_region
      _
    $region85: #{tpu_custom_call.1} parent=1 // pred_fallthru
      _
    %v70 = vld [vmem:[%s0] sm:$0xff]
    %v71 = vld [vmem:[%s0 + $0x8] sm:$0xff]
    %v72 = vld [vmem:[%s0 + $0x10] sm:$0xff]
    %v73 = vld [vmem:[%s0 + $0x18] sm:$0xff]
    %v74 = vld [vmem:[%s0 + $0x20] sm:$0xff]
    %v75 = vld [vmem:[%s0 + $0x28] sm:$0xff]
    %v76 = vld [vmem:[%s0 + $0x30] sm:$0xff]
    %v77 = vld [vmem:[%s0 + $0x38] sm:$0xff]
    %v78 = vld [vmem:[%s3] sm:$0x1]
    %v79 = vld [vmem:[%s4] sm:$0x1]
    %vm80 = vcmask 261120
    %v81 = vsel %vm80, %v70, 0.0
    %82 = vadd.xlane.f32.xlu0 %v81
    %v83 = vpop.xlane.xlu0 %82
    %v84 = vsel %vm80, %v71, 0.0
    %85 = vadd.xlane.f32.xlu0 %v84
    %v86 = vpop.xlane.xlu0 %85
    %v87 = vsel %vm80, %v72, 0.0
    %88 = vadd.xlane.f32.xlu0 %v87
    %v89 = vpop.xlane.xlu0 %88
    %v90 = vsel %vm80, %v73, 0.0
    %91 = vadd.xlane.f32.xlu0 %v90
    %v92 = vpop.xlane.xlu0 %91
    %v93 = vsel %vm80, %v74, 0.0
    %94 = vadd.xlane.f32.xlu0 %v93
    %v95 = vpop.xlane.xlu0 %94
    %v96 = vsel %vm80, %v75, 0.0
    %97 = vadd.xlane.f32.xlu0 %v96
    %v98 = vpop.xlane.xlu0 %97
    %v99 = vsel %vm80, %v76, 0.0
    %100 = vadd.xlane.f32.xlu0 %v99
    %v101 = vpop.xlane.xlu0 %100
    %v102 = vsel %vm80, %v77, 0.0
    %103 = vadd.xlane.f32.xlu0 %v102
    %v104 = vpop.xlane.xlu0 %103
    %v105 = vrcp.pop 32.0
    %v106 = vmul.f32 32.0, %v105
    %v107 = vsub.f32 1.0, %v106
    %v108 = vmul.f32 %v105, %v107
    %v109 = vadd.f32 %v105, %v108
    %vm110 = vweird.f32 %v105
    %v111 = vsel %vm110, %v105, %v109
    %v112 = vmul.f32 %v83, %v111
    %v113 = vmul.f32 %v86, %v111
    %v114 = vmul.f32 %v89, %v111
    %v115 = vmul.f32 %v92, %v111
    %v116 = vmul.f32 %v95, %v111
    %v117 = vmul.f32 %v98, %v111
    %v118 = vmul.f32 %v101, %v111
    %v119 = vmul.f32 %v104, %v111
    %v120 = vsub.f32 %v70, %v112
    %v121 = vsub.f32 %v71, %v113
    %v122 = vsub.f32 %v72, %v114
    %v123 = vsub.f32 %v73, %v115
    %v124 = vsub.f32 %v74, %v116
    %v125 = vsub.f32 %v75, %v117
    %v126 = vsub.f32 %v76, %v118
    %v127 = vsub.f32 %v77, %v119
    %v128 = vmul.f32 %v120, %v120
    %v129 = vmul.f32 %v121, %v121
    %v130 = vmul.f32 %v122, %v122
    %v131 = vmul.f32 %v123, %v123
    %v132 = vmul.f32 %v124, %v124
    %v133 = vmul.f32 %v125, %v125
    %v134 = vmul.f32 %v126, %v126
    %v135 = vmul.f32 %v127, %v127
    %v136 = vsel %vm80, %v128, 0.0
    %137 = vadd.xlane.f32.xlu0 %v136
    %v138 = vpop.xlane.xlu0 %137
    %v139 = vsel %vm80, %v129, 0.0
    %140 = vadd.xlane.f32.xlu0 %v139
    %v141 = vpop.xlane.xlu0 %140
    %v142 = vsel %vm80, %v130, 0.0
    %143 = vadd.xlane.f32.xlu0 %v142
    %v144 = vpop.xlane.xlu0 %143
    %v145 = vsel %vm80, %v131, 0.0
    %146 = vadd.xlane.f32.xlu0 %v145
    %v147 = vpop.xlane.xlu0 %146
    %v148 = vsel %vm80, %v132, 0.0
    %149 = vadd.xlane.f32.xlu0 %v148
    %v150 = vpop.xlane.xlu0 %149
    %v151 = vsel %vm80, %v133, 0.0
    %152 = vadd.xlane.f32.xlu0 %v151
    %v153 = vpop.xlane.xlu0 %152
    %v154 = vsel %vm80, %v134, 0.0
    %155 = vadd.xlane.f32.xlu0 %v154
    %v156 = vpop.xlane.xlu0 %155
    %v157 = vsel %vm80, %v135, 0.0
    %158 = vadd.xlane.f32.xlu0 %v157
    %v159 = vpop.xlane.xlu0 %158
    %v160 = vmul.f32 %v138, %v111
    %v161 = vmul.f32 %v141, %v111
    %v162 = vmul.f32 %v144, %v111
    %v163 = vmul.f32 %v147, %v111
    %v164 = vmul.f32 %v150, %v111
    %v165 = vmul.f32 %v153, %v111
    %v166 = vmul.f32 %v156, %v111
    %v167 = vmul.f32 %v159, %v111
    %v168 = vadd.f32 %v160, 1e-05
    %v169 = vadd.f32 %v161, 1e-05
    %v170 = vadd.f32 %v162, 1e-05
    %v171 = vadd.f32 %v163, 1e-05
    %v172 = vadd.f32 %v164, 1e-05
    %v173 = vadd.f32 %v165, 1e-05
    %v174 = vadd.f32 %v166, 1e-05
    %v175 = vadd.f32 %v167, 1e-05
    %v176 = vrsqrt.pop %v168
    %v177 = vmul.f32 %v176, %v168
    %v178 = vmul.f32 %v177, %v176
    %v179 = vmul.f32 0.5, %v178
    %v180 = vsub.f32 1.5, %v179
    %v181 = vmul.f32 %v176, %v180
    %vm182 = vweird.f32 %v168
    %vm183 = vweird.f32 %v176
    %vm184 = vmor %vm182, %vm183
    %v185 = vsel %vm184, %v176, %v181
    %v186 = vrsqrt.pop %v169
    %v187 = vmul.f32 %v186, %v169
    %v188 = vmul.f32 %v187, %v186
    %v189 = vmul.f32 0.5, %v188
    %v190 = vsub.f32 1.5, %v189
    %v191 = vmul.f32 %v186, %v190
    %vm192 = vweird.f32 %v169
    %vm193 = vweird.f32 %v186
    %vm194 = vmor %vm192, %vm193
    %v195 = vsel %vm194, %v186, %v191
    %v196 = vrsqrt.pop %v170
    %v197 = vmul.f32 %v196, %v170
    %v198 = vmul.f32 %v197, %v196
    %v199 = vmul.f32 0.5, %v198
    %v200 = vsub.f32 1.5, %v199
    %v201 = vmul.f32 %v196, %v200
    %vm202 = vweird.f32 %v170
    %vm203 = vweird.f32 %v196
    %vm204 = vmor %vm202, %vm203
    %v205 = vsel %vm204, %v196, %v201
    %v206 = vrsqrt.pop %v171
    %v207 = vmul.f32 %v206, %v171
    %v208 = vmul.f32 %v207, %v206
    %v209 = vmul.f32 0.5, %v208
    %v210 = vsub.f32 1.5, %v209
    %v211 = vmul.f32 %v206, %v210
    %vm212 = vweird.f32 %v171
    %vm213 = vweird.f32 %v206
    %vm214 = vmor %vm212, %vm213
    %v215 = vsel %vm214, %v206, %v211
    %v216 = vrsqrt.pop %v172
    %v217 = vmul.f32 %v216, %v172
    %v218 = vmul.f32 %v217, %v216
    %v219 = vmul.f32 0.5, %v218
    %v220 = vsub.f32 1.5, %v219
    %v221 = vmul.f32 %v216, %v220
    %vm222 = vweird.f32 %v172
    %vm223 = vweird.f32 %v216
    %vm224 = vmor %vm222, %vm223
    %v225 = vsel %vm224, %v216, %v221
    %v226 = vrsqrt.pop %v173
    %v227 = vmul.f32 %v226, %v173
    %v228 = vmul.f32 %v227, %v226
    %v229 = vmul.f32 0.5, %v228
    %v230 = vsub.f32 1.5, %v229
    %v231 = vmul.f32 %v226, %v230
    %vm232 = vweird.f32 %v173
    %vm233 = vweird.f32 %v226
    %vm234 = vmor %vm232, %vm233
    %v235 = vsel %vm234, %v226, %v231
    %v236 = vrsqrt.pop %v174
    %v237 = vmul.f32 %v236, %v174
    %v238 = vmul.f32 %v237, %v236
    %v239 = vmul.f32 0.5, %v238
    %v240 = vsub.f32 1.5, %v239
    %v241 = vmul.f32 %v236, %v240
    %vm242 = vweird.f32 %v174
    %vm243 = vweird.f32 %v236
    %vm244 = vmor %vm242, %vm243
    %v245 = vsel %vm244, %v236, %v241
    %v246 = vrsqrt.pop %v175
    %v247 = vmul.f32 %v246, %v175
    %v248 = vmul.f32 %v247, %v246
    %v249 = vmul.f32 0.5, %v248
    %v250 = vsub.f32 1.5, %v249
    %v251 = vmul.f32 %v246, %v250
    %vm252 = vweird.f32 %v175
    %vm253 = vweird.f32 %v246
    %vm254 = vmor %vm252, %vm253
    %v255 = vsel %vm254, %v246, %v251
    %v256 = vmul.f32 %v120, %v185
    %v257 = vmul.f32 %v121, %v195
    %v258 = vmul.f32 %v122, %v205
    %v259 = vmul.f32 %v123, %v215
    %v260 = vmul.f32 %v124, %v225
    %v261 = vmul.f32 %v125, %v235
    %v262 = vmul.f32 %v126, %v245
    %v263 = vmul.f32 %v127, %v255
    %v265 = vperm.slane %v78, 0
    %v267 = vmul.f32 %v256, %v265
    %v268 = vmul.f32 %v257, %v265
    %v269 = vmul.f32 %v258, %v265
    %v270 = vmul.f32 %v259, %v265
    %v271 = vmul.f32 %v260, %v265
    %v272 = vmul.f32 %v261, %v265
    %v273 = vmul.f32 %v262, %v265
    %v274 = vmul.f32 %v263, %v265
    %v276 = vperm.slane %v79, 0
    %v278 = vadd.f32 %v267, %v276
    %v279 = vadd.f32 %v268, %v276
    %v280 = vadd.f32 %v269, %v276
    %v281 = vadd.f32 %v270, %v276
    %v282 = vadd.f32 %v271, %v276
    %v283 = vadd.f32 %v272, %v276
    %v284 = vadd.f32 %v273, %v276
    %v285 = vadd.f32 %v274, %v276
    %v286 = vpack.c.bf16 %v279, %v278
    %v287 = vpack.c.bf16 %v281, %v280
    %v288 = vpack.c.bf16 %v283, %v282
    %v289 = vpack.c.bf16 %v285, %v284
    %v290 = vld [vmem:[%s5] sm:$0xf]
    %v291 = vld [vmem:[%s5 + $0x4] sm:$0xf]
    %v292 = vld [vmem:[%s5 + $0x8] sm:$0xf]
    %v293 = vld [vmem:[%s5 + $0xc] sm:$0xf]
    %v294 = vld [vmem:[%s6] sm:$0x1]
    %v296 = vperm.slane %v294, 0
    %v302 = vunpack.c.l.b16 %v290
    %v303 = vunpack.c.l.b16 %v291
    %v304 = vunpack.c.l.b16 %v292
    %v305 = vunpack.c.l.b16 %v293
    %v306 = vpack.c.b16 %v303, %v302
    %v307 = vpack.c.b16 %v305, %v304
    %v311 = vsel %vm80, %v286, 0
    %v314 = vsel %vm80, %v287, 0
    %v317 = vsel %vm80, %v288, 0
    %v320 = vsel %vm80, %v289, 0
    %322 = vmatpush.bf16.msra.mxu0 0
    %323 = vmatpush.bf16.msra.mxu0 0
    %324 = vmatpush.bf16.msra.mxu0 0
    %325 = vmatpush.bf16.msra.mxu0 0
    %326 = vmatpush.bf16.msra.mxu0 0
    %327 = vmatpush.bf16.msra.mxu0 0
    %328 = vmatpush.bf16.msra.mxu0 %v307
    %329 = vmatpush.bf16.msra.mxu0 %v306
    %330 = vmatmul.bf16.gmra.mxu0 %v311
    %v331 = vpop.f32.mrf.mxu0
    %v332 = vadd.f32 %v296, %v331
    %v333 = vpop.f32.mrf.mxu0
    %v334 = vadd.f32 %v296, %v333
    %335 = vmatmul.bf16.gmra.mxu0 %v314
    %v336 = vpop.f32.mrf.mxu0
    %v337 = vadd.f32 %v296, %v336
    %v338 = vpop.f32.mrf.mxu0
    %v339 = vadd.f32 %v296, %v338
    %340 = vmatmul.bf16.gmra.mxu0 %v317
    %v341 = vpop.f32.mrf.mxu0
    %v342 = vadd.f32 %v296, %v341
    %v343 = vpop.f32.mrf.mxu0
    %v344 = vadd.f32 %v296, %v343
    %345 = vmatmul.bf16.gmra.mxu0 %v320
    %v346 = vpop.f32.mrf.mxu0
    %v347 = vadd.f32 %v296, %v346
    %v348 = vpop.f32.mrf.mxu0
    %v349 = vadd.f32 %v296, %v348
    %350 = vdwg.mxu0
    %v351 = vld [vmem:[%s7] sm:$0xf]
    %v352 = vld [vmem:[%s7 + $0x4] sm:$0xf]
    %v353 = vld [vmem:[%s7 + $0x8] sm:$0xf]
    %v354 = vld [vmem:[%s7 + $0xc] sm:$0xf]
    %v355 = vld [vmem:[%s8] sm:$0x1]
    %v357 = vperm.slane %v355, 0
    %v363 = vunpack.c.l.b16 %v351
    %v364 = vunpack.c.l.b16 %v352
    %v365 = vunpack.c.l.b16 %v353
    %v366 = vunpack.c.l.b16 %v354
    %v367 = vpack.c.b16 %v364, %v363
    %v368 = vpack.c.b16 %v366, %v365
    %371 = vmatpush.bf16.msra.mxu0 0
    %372 = vmatpush.bf16.msra.mxu0 0
    %373 = vmatpush.bf16.msra.mxu0 0
    %374 = vmatpush.bf16.msra.mxu0 0
    %375 = vmatpush.bf16.msra.mxu0 0
    %376 = vmatpush.bf16.msra.mxu0 0
    %377 = vmatpush.bf16.msra.mxu0 %v368
    %378 = vmatpush.bf16.msra.mxu0 %v367
    %379 = vmatmul.bf16.gmra.mxu0 %v311
    %v380 = vpop.f32.mrf.mxu0
    %v381 = vadd.f32 %v357, %v380
    %v382 = vpop.f32.mrf.mxu0
    %v383 = vadd.f32 %v357, %v382
    %384 = vmatmul.bf16.gmra.mxu0 %v314
    %v385 = vpop.f32.mrf.mxu0
    %v386 = vadd.f32 %v357, %v385
    %v387 = vpop.f32.mrf.mxu0
    %v388 = vadd.f32 %v357, %v387
    %389 = vmatmul.bf16.gmra.mxu0 %v317
    %v390 = vpop.f32.mrf.mxu0
    %v391 = vadd.f32 %v357, %v390
    %v392 = vpop.f32.mrf.mxu0
    %v393 = vadd.f32 %v357, %v392
    %394 = vmatmul.bf16.gmra.mxu0 %v320
    %v395 = vpop.f32.mrf.mxu0
    %v396 = vadd.f32 %v357, %v395
    %v397 = vpop.f32.mrf.mxu0
    %v398 = vadd.f32 %v357, %v397
    %399 = vdwg.mxu0
    %v400 = vld [vmem:[%s9] sm:$0xf]
    %v401 = vld [vmem:[%s9 + $0x4] sm:$0xf]
    %v402 = vld [vmem:[%s9 + $0x8] sm:$0xf]
    %v403 = vld [vmem:[%s9 + $0xc] sm:$0xf]
    %v404 = vld [vmem:[%s10] sm:$0x1]
    %v406 = vperm.slane %v404, 0
    %v412 = vunpack.c.l.b16 %v400
    %v413 = vunpack.c.l.b16 %v401
    %v414 = vunpack.c.l.b16 %v402
    %v415 = vunpack.c.l.b16 %v403
    %v416 = vpack.c.b16 %v413, %v412
    %v417 = vpack.c.b16 %v415, %v414
    %420 = vmatpush.bf16.msra.mxu0 0
    %421 = vmatpush.bf16.msra.mxu0 0
    %422 = vmatpush.bf16.msra.mxu0 0
    %423 = vmatpush.bf16.msra.mxu0 0
    %424 = vmatpush.bf16.msra.mxu0 0
    %425 = vmatpush.bf16.msra.mxu0 0
    %426 = vmatpush.bf16.msra.mxu0 %v417
    %427 = vmatpush.bf16.msra.mxu0 %v416
    %428 = vmatmul.bf16.gmra.mxu0 %v311
    %v429 = vpop.f32.mrf.mxu0
    %v430 = vadd.f32 %v406, %v429
    %v431 = vpop.f32.mrf.mxu0
    %v432 = vadd.f32 %v406, %v431
    %433 = vmatmul.bf16.gmra.mxu0 %v314
    %v434 = vpop.f32.mrf.mxu0
    %v435 = vadd.f32 %v406, %v434
    %v436 = vpop.f32.mrf.mxu0
    %v437 = vadd.f32 %v406, %v436
    %438 = vmatmul.bf16.gmra.mxu0 %v317
    %v439 = vpop.f32.mrf.mxu0
    %v440 = vadd.f32 %v406, %v439
    %v441 = vpop.f32.mrf.mxu0
    %v442 = vadd.f32 %v406, %v441
    %443 = vmatmul.bf16.gmra.mxu0 %v320
    %v444 = vpop.f32.mrf.mxu0
    %v445 = vadd.f32 %v406, %v444
    %v446 = vpop.f32.mrf.mxu0
    %v447 = vadd.f32 %v406, %v446
    %448 = vdwg.mxu0
    %v449 = vpack.c.bf16 %v334, %v332
    %v450 = vpack.c.bf16 %v339, %v337
    %v451 = vpack.c.bf16 %v344, %v342
    %v452 = vpack.c.bf16 %v349, %v347
    %v453 = vpack.c.bf16 %v383, %v381
    %v454 = vpack.c.bf16 %v388, %v386
    %v455 = vpack.c.bf16 %v393, %v391
    %v456 = vpack.c.bf16 %v398, %v396
    %v458 = vsel %vm80, %v449, 0
    %v461 = vsel %vm80, %v450, 0
    %v464 = vsel %vm80, %v451, 0
    %v467 = vsel %vm80, %v452, 0
    %v470 = vsel %vm80, %v453, 0
    %v473 = vsel %vm80, %v454, 0
    %v476 = vsel %vm80, %v455, 0
    %v479 = vsel %vm80, %v456, 0
    %481 = vmatpush.bf16.xpose.msra.mxu0 0
    %482 = vmatpush.bf16.xpose.msra.mxu0 0
    %483 = vmatpush.bf16.xpose.msra.mxu0 0
    %484 = vmatpush.bf16.xpose.msra.mxu0 0
    %485 = vmatpush.bf16.xpose.msra.mxu0 %v479
    %486 = vmatpush.bf16.xpose.msra.mxu0 %v476
    %487 = vmatpush.bf16.xpose.msra.mxu0 %v473
    %488 = vmatpush.bf16.xpose.msra.mxu0 %v470
    %489 = vmatmul.bf16.gmra.mxu0 %v458
    %v490 = vpop.f32.mrf.mxu0
    %v491 = vadd.f32 0.0, %v490
    %v492 = vpop.f32.mrf.mxu0
    %v493 = vadd.f32 0.0, %v492
    %494 = vmatmul.bf16.gmra.mxu0 %v461
    %v495 = vpop.f32.mrf.mxu0
    %v496 = vadd.f32 0.0, %v495
    %v497 = vpop.f32.mrf.mxu0
    %v498 = vadd.f32 0.0, %v497
    %499 = vmatmul.bf16.gmra.mxu0 %v464
    %v500 = vpop.f32.mrf.mxu0
    %v501 = vadd.f32 0.0, %v500
    %v502 = vpop.f32.mrf.mxu0
    %v503 = vadd.f32 0.0, %v502
    %504 = vmatmul.bf16.gmra.mxu0 %v467
    %v505 = vpop.f32.mrf.mxu0
    %v506 = vadd.f32 0.0, %v505
    %v507 = vpop.f32.mrf.mxu0
    %v508 = vadd.f32 0.0, %v507
    %509 = vdwg.mxu0
    %v510 = vld [vmem:[%s1] sm:$0xff]
    %v511 = vld [vmem:[%s1 + $0x8] sm:$0xff]
    %v512 = vld [vmem:[%s1 + $0x10] sm:$0xff]
    %v513 = vld [vmem:[%s1 + $0x18] sm:$0xff]
    %v514 = vld [vmem:[%s1 + $0x20] sm:$0xff]
    %v515 = vld [vmem:[%s1 + $0x28] sm:$0xff]
    %v516 = vld [vmem:[%s1 + $0x30] sm:$0xff]
    %v517 = vld [vmem:[%s1 + $0x38] sm:$0xff]
    %v518 = vld [vmem:[%s2] sm:$0x1]
    %519 = vset.pattern.permute.xlu0 0
    %520 = vperm.xlu0 %519, %v510
    %v521 = vpop.permute.xlu0 %520
    %522 = vset.pattern.permute.xlu0 0
    %523 = vperm.xlu0 %522, %v511
    %v524 = vpop.permute.xlu0 %523
    %525 = vset.pattern.permute.xlu0 0
    %526 = vperm.xlu0 %525, %v512
    %v527 = vpop.permute.xlu0 %526
    %528 = vset.pattern.permute.xlu0 0
    %529 = vperm.xlu0 %528, %v513
    %v530 = vpop.permute.xlu0 %529
    %531 = vset.pattern.permute.xlu0 0
    %532 = vperm.xlu0 %531, %v514
    %v533 = vpop.permute.xlu0 %532
    %534 = vset.pattern.permute.xlu0 0
    %535 = vperm.xlu0 %534, %v515
    %v536 = vpop.permute.xlu0 %535
    %537 = vset.pattern.permute.xlu0 0
    %538 = vperm.xlu0 %537, %v516
    %v539 = vpop.permute.xlu0 %538
    %540 = vset.pattern.permute.xlu0 0
    %541 = vperm.xlu0 %540, %v517
    %v542 = vpop.permute.xlu0 %541
    %v543 = vperm.slane %v518, 0
    %vm544 = vcmp.eq.s32.totalorder %v521, %v543
    %vm545 = vcmp.eq.s32.totalorder %v524, %v543
    %vm546 = vcmp.eq.s32.totalorder %v527, %v543
    %vm547 = vcmp.eq.s32.totalorder %v530, %v543
    %vm548 = vcmp.eq.s32.totalorder %v533, %v543
    %vm549 = vcmp.eq.s32.totalorder %v536, %v543
    %vm550 = vcmp.eq.s32.totalorder %v539, %v543
    %vm551 = vcmp.eq.s32.totalorder %v542, %v543
    %v552 = vsel %vm544, %v491, -1e+09
    %v553 = vsel %vm545, %v493, -1e+09
    %v554 = vsel %vm546, %v496, -1e+09
    %v555 = vsel %vm547, %v498, -1e+09
    %v556 = vsel %vm548, %v501, -1e+09
    %v557 = vsel %vm549, %v503, -1e+09
    %v558 = vsel %vm550, %v506, -1e+09
    %v559 = vsel %vm551, %v508, -1e+09
    %vm560 = vcmask 523264
    %v561 = vsel %vm560, %v552, -inf
    %562 = vmax.xlane.f32.xlu0 %v561
    %v563 = vpop.xlane.xlu0 %562
    %v564 = vsel %vm560, %v553, -inf
    %565 = vmax.xlane.f32.xlu0 %v564
    %v566 = vpop.xlane.xlu0 %565
    %v567 = vsel %vm560, %v554, -inf
    %568 = vmax.xlane.f32.xlu0 %v567
    %v569 = vpop.xlane.xlu0 %568
    %v570 = vsel %vm560, %v555, -inf
    %571 = vmax.xlane.f32.xlu0 %v570
    %v572 = vpop.xlane.xlu0 %571
    %v573 = vsel %vm560, %v556, -inf
    %574 = vmax.xlane.f32.xlu0 %v573
    %v575 = vpop.xlane.xlu0 %574
    %v576 = vsel %vm560, %v557, -inf
    %577 = vmax.xlane.f32.xlu0 %v576
    %v578 = vpop.xlane.xlu0 %577
    %v579 = vsel %vm560, %v558, -inf
    %580 = vmax.xlane.f32.xlu0 %v579
    %v581 = vpop.xlane.xlu0 %580
    %v582 = vsel %vm560, %v559, -inf
    %583 = vmax.xlane.f32.xlu0 %v582
    %v584 = vpop.xlane.xlu0 %583
    %v585 = vsub.f32 %v552, %v563
    %v586 = vsub.f32 %v553, %v566
    %v587 = vsub.f32 %v554, %v569
    %v588 = vsub.f32 %v555, %v572
    %v589 = vsub.f32 %v556, %v575
    %v590 = vsub.f32 %v557, %v578
    %v591 = vsub.f32 %v558, %v581
    %v592 = vsub.f32 %v559, %v584
    %v593 = vmul.f32 %v585, 1.442695
    %v594 = vpow.pop %v593
    %v595 = vmul.f32 %v586, 1.442695
    %v596 = vpow.pop %v595
    %v597 = vmul.f32 %v587, 1.442695
    %v598 = vpow.pop %v597
    %v599 = vmul.f32 %v588, 1.442695
    %v600 = vpow.pop %v599
    %v601 = vmul.f32 %v589, 1.442695
    %v602 = vpow.pop %v601
    %v603 = vmul.f32 %v590, 1.442695
    %v604 = vpow.pop %v603
    %v605 = vmul.f32 %v591, 1.442695
    %v606 = vpow.pop %v605
    %v607 = vmul.f32 %v592, 1.442695
    %v608 = vpow.pop %v607
    %v609 = vsel %vm560, %v594, 0.0
    %610 = vadd.xlane.f32.xlu0 %v609
    %v611 = vpop.xlane.xlu0 %610
    %v612 = vsel %vm560, %v596, 0.0
    %613 = vadd.xlane.f32.xlu0 %v612
    %v614 = vpop.xlane.xlu0 %613
    %v615 = vsel %vm560, %v598, 0.0
    %616 = vadd.xlane.f32.xlu0 %v615
    %v617 = vpop.xlane.xlu0 %616
    %v618 = vsel %vm560, %v600, 0.0
    %619 = vadd.xlane.f32.xlu0 %v618
    %v620 = vpop.xlane.xlu0 %619
    %v621 = vsel %vm560, %v602, 0.0
    %622 = vadd.xlane.f32.xlu0 %v621
    %v623 = vpop.xlane.xlu0 %622
    %v624 = vsel %vm560, %v604, 0.0
    %625 = vadd.xlane.f32.xlu0 %v624
    %v626 = vpop.xlane.xlu0 %625
    %v627 = vsel %vm560, %v606, 0.0
    %628 = vadd.xlane.f32.xlu0 %v627
    %v629 = vpop.xlane.xlu0 %628
    %v630 = vsel %vm560, %v608, 0.0
    %631 = vadd.xlane.f32.xlu0 %v630
    %v632 = vpop.xlane.xlu0 %631
    %v633 = vrcp.pop %v611
    %v634 = vrcp.pop %v614
    %v635 = vrcp.pop %v617
    %v636 = vrcp.pop %v620
    %v637 = vrcp.pop %v623
    %v638 = vrcp.pop %v626
    %v639 = vrcp.pop %v629
    %v640 = vrcp.pop %v632
    %v641 = vmul.f32 %v594, %v633
    %v642 = vmul.f32 %v596, %v634
    %v643 = vmul.f32 %v598, %v635
    %v644 = vmul.f32 %v600, %v636
    %v645 = vmul.f32 %v602, %v637
    %v646 = vmul.f32 %v604, %v638
    %v647 = vmul.f32 %v606, %v639
    %v648 = vmul.f32 %v608, %v640
    %v649 = vpack.c.bf16 %v642, %v641
    %v650 = vpack.c.bf16 %v644, %v643
    %v651 = vpack.c.bf16 %v646, %v645
    %v652 = vpack.c.bf16 %v648, %v647
    %v653 = vpack.c.bf16 %v432, %v430
    %v654 = vpack.c.bf16 %v437, %v435
    %v655 = vpack.c.bf16 %v442, %v440
    %v656 = vpack.c.bf16 %v447, %v445
    %v658 = vsel %vm560, %v649, 0
    %v661 = vsel %vm560, %v650, 0
    %v664 = vsel %vm560, %v651, 0
    %v667 = vsel %vm560, %v652, 0
    %669 = vmatpush.bf16.msra.mxu0 0
    %670 = vmatpush.bf16.msra.mxu0 0
    %671 = vmatpush.bf16.msra.mxu0 0
    %672 = vmatpush.bf16.msra.mxu0 0
    %673 = vmatpush.bf16.msra.mxu0 %v656
    %674 = vmatpush.bf16.msra.mxu0 %v655
    %675 = vmatpush.bf16.msra.mxu0 %v654
    %676 = vmatpush.bf16.msra.mxu0 %v653
    %677 = vmatmul.bf16.gmra.mxu0 %v658
    %v678 = vpop.f32.mrf.mxu0
    %v679 = vadd.f32 0.0, %v678
    %v680 = vpop.f32.mrf.mxu0
    %v681 = vadd.f32 0.0, %v680
    %682 = vmatmul.bf16.gmra.mxu0 %v661
    %v683 = vpop.f32.mrf.mxu0
    %v684 = vadd.f32 0.0, %v683
    %v685 = vpop.f32.mrf.mxu0
    %v686 = vadd.f32 0.0, %v685
    %687 = vmatmul.bf16.gmra.mxu0 %v664
    %v688 = vpop.f32.mrf.mxu0
    %v689 = vadd.f32 0.0, %v688
    %v690 = vpop.f32.mrf.mxu0
    %v691 = vadd.f32 0.0, %v690
    %692 = vmatmul.bf16.gmra.mxu0 %v667
    %v693 = vpop.f32.mrf.mxu0
    %v694 = vadd.f32 0.0, %v693
    %v695 = vpop.f32.mrf.mxu0
    %v696 = vadd.f32 0.0, %v695
    %697 = vdwg.mxu0
    %v698 = vpack.c.bf16 %v681, %v679
    %v699 = vpack.c.bf16 %v686, %v684
    %v700 = vpack.c.bf16 %v691, %v689
    %v701 = vpack.c.bf16 %v696, %v694
    %v702 = vld [vmem:[%s11] sm:$0xf]
    %v703 = vld [vmem:[%s11 + $0x4] sm:$0xf]
    %v704 = vld [vmem:[%s11 + $0x8] sm:$0xf]
    %v705 = vld [vmem:[%s11 + $0xc] sm:$0xf]
    %v706 = vld [vmem:[%s12] sm:$0x1]
    %v708 = vperm.slane %v706, 0
    %v714 = vunpack.c.l.b16 %v702
    %v715 = vunpack.c.l.b16 %v703
    %v716 = vunpack.c.l.b16 %v704
    %v717 = vunpack.c.l.b16 %v705
    %v718 = vpack.c.b16 %v715, %v714
    %v719 = vpack.c.b16 %v717, %v716
    %v723 = vsel %vm80, %v698, 0
    %v726 = vsel %vm80, %v699, 0
    %v729 = vsel %vm80, %v700, 0
    %v732 = vsel %vm80, %v701, 0
    %734 = vmatpush.bf16.msra.mxu0 0
    %735 = vmatpush.bf16.msra.mxu0 0
    %736 = vmatpush.bf16.msra.mxu0 0
    %737 = vmatpush.bf16.msra.mxu0 0
    %738 = vmatpush.bf16.msra.mxu0 0
    %739 = vmatpush.bf16.msra.mxu0 0
    %740 = vmatpush.bf16.msra.mxu0 %v719
    %741 = vmatpush.bf16.msra.mxu0 %v718
    %742 = vmatmul.bf16.gmra.mxu0 %v723
    %v743 = vpop.f32.mrf.mxu0
    %v744 = vadd.f32 %v708, %v743
    %v745 = vpop.f32.mrf.mxu0
    %v746 = vadd.f32 %v708, %v745
    %747 = vmatmul.bf16.gmra.mxu0 %v726
    %v748 = vpop.f32.mrf.mxu0
    %v749 = vadd.f32 %v708, %v748
    %v750 = vpop.f32.mrf.mxu0
    %v751 = vadd.f32 %v708, %v750
    %752 = vmatmul.bf16.gmra.mxu0 %v729
    %v753 = vpop.f32.mrf.mxu0
    %v754 = vadd.f32 %v708, %v753
    %v755 = vpop.f32.mrf.mxu0
    %v756 = vadd.f32 %v708, %v755
    %757 = vmatmul.bf16.gmra.mxu0 %v732
    %v758 = vpop.f32.mrf.mxu0
    %v759 = vadd.f32 %v708, %v758
    %v760 = vpop.f32.mrf.mxu0
    %v761 = vadd.f32 %v708, %v760
    %762 = vdwg.mxu0
    %v763 = vadd.f32 %v70, %v744
    %v764 = vadd.f32 %v71, %v746
    %v765 = vadd.f32 %v72, %v749
    %v766 = vadd.f32 %v73, %v751
    %v767 = vadd.f32 %v74, %v754
    %v768 = vadd.f32 %v75, %v756
    %v769 = vadd.f32 %v76, %v759
    %v770 = vadd.f32 %v77, %v761
    %v771 = vld [vmem:[%s13] sm:$0x1]
    %v772 = vld [vmem:[%s14] sm:$0x1]
    %v773 = vsel %vm80, %v763, 0.0
    %774 = vadd.xlane.f32.xlu0 %v773
    %v775 = vpop.xlane.xlu0 %774
    %v776 = vsel %vm80, %v764, 0.0
    %777 = vadd.xlane.f32.xlu0 %v776
    %v778 = vpop.xlane.xlu0 %777
    %v779 = vsel %vm80, %v765, 0.0
    %780 = vadd.xlane.f32.xlu0 %v779
    %v781 = vpop.xlane.xlu0 %780
    %v782 = vsel %vm80, %v766, 0.0
    %783 = vadd.xlane.f32.xlu0 %v782
    %v784 = vpop.xlane.xlu0 %783
    %v785 = vsel %vm80, %v767, 0.0
    %786 = vadd.xlane.f32.xlu0 %v785
    %v787 = vpop.xlane.xlu0 %786
    %v788 = vsel %vm80, %v768, 0.0
    %789 = vadd.xlane.f32.xlu0 %v788
    %v790 = vpop.xlane.xlu0 %789
    %v791 = vsel %vm80, %v769, 0.0
    %792 = vadd.xlane.f32.xlu0 %v791
    %v793 = vpop.xlane.xlu0 %792
    %v794 = vsel %vm80, %v770, 0.0
    %795 = vadd.xlane.f32.xlu0 %v794
    %v796 = vpop.xlane.xlu0 %795
    %v797 = vmul.f32 %v775, %v111
    %v798 = vmul.f32 %v778, %v111
    %v799 = vmul.f32 %v781, %v111
    %v800 = vmul.f32 %v784, %v111
    %v801 = vmul.f32 %v787, %v111
    %v802 = vmul.f32 %v790, %v111
    %v803 = vmul.f32 %v793, %v111
    %v804 = vmul.f32 %v796, %v111
    %v805 = vsub.f32 %v763, %v797
    %v806 = vsub.f32 %v764, %v798
    %v807 = vsub.f32 %v765, %v799
    %v808 = vsub.f32 %v766, %v800
    %v809 = vsub.f32 %v767, %v801
    %v810 = vsub.f32 %v768, %v802
    %v811 = vsub.f32 %v769, %v803
    %v812 = vsub.f32 %v770, %v804
    %v813 = vmul.f32 %v805, %v805
    %v814 = vmul.f32 %v806, %v806
    %v815 = vmul.f32 %v807, %v807
    %v816 = vmul.f32 %v808, %v808
    %v817 = vmul.f32 %v809, %v809
    %v818 = vmul.f32 %v810, %v810
    %v819 = vmul.f32 %v811, %v811
    %v820 = vmul.f32 %v812, %v812
    %v821 = vsel %vm80, %v813, 0.0
    %822 = vadd.xlane.f32.xlu0 %v821
    %v823 = vpop.xlane.xlu0 %822
    %v824 = vsel %vm80, %v814, 0.0
    %825 = vadd.xlane.f32.xlu0 %v824
    %v826 = vpop.xlane.xlu0 %825
    %v827 = vsel %vm80, %v815, 0.0
    %828 = vadd.xlane.f32.xlu0 %v827
    %v829 = vpop.xlane.xlu0 %828
    %v830 = vsel %vm80, %v816, 0.0
    %831 = vadd.xlane.f32.xlu0 %v830
    %v832 = vpop.xlane.xlu0 %831
    %v833 = vsel %vm80, %v817, 0.0
    %834 = vadd.xlane.f32.xlu0 %v833
    %v835 = vpop.xlane.xlu0 %834
    %v836 = vsel %vm80, %v818, 0.0
    %837 = vadd.xlane.f32.xlu0 %v836
    %v838 = vpop.xlane.xlu0 %837
    %v839 = vsel %vm80, %v819, 0.0
    %840 = vadd.xlane.f32.xlu0 %v839
    %v841 = vpop.xlane.xlu0 %840
    %v842 = vsel %vm80, %v820, 0.0
    %843 = vadd.xlane.f32.xlu0 %v842
    %v844 = vpop.xlane.xlu0 %843
    %v845 = vmul.f32 %v823, %v111
    %v846 = vmul.f32 %v826, %v111
    %v847 = vmul.f32 %v829, %v111
    %v848 = vmul.f32 %v832, %v111
    %v849 = vmul.f32 %v835, %v111
    %v850 = vmul.f32 %v838, %v111
    %v851 = vmul.f32 %v841, %v111
    %v852 = vmul.f32 %v844, %v111
    %v853 = vadd.f32 %v845, 1e-05
    %v854 = vadd.f32 %v846, 1e-05
    %v855 = vadd.f32 %v847, 1e-05
    %v856 = vadd.f32 %v848, 1e-05
    %v857 = vadd.f32 %v849, 1e-05
    %v858 = vadd.f32 %v850, 1e-05
    %v859 = vadd.f32 %v851, 1e-05
    %v860 = vadd.f32 %v852, 1e-05
    %v861 = vrsqrt.pop %v853
    %v862 = vmul.f32 %v861, %v853
    %v863 = vmul.f32 %v862, %v861
    %v864 = vmul.f32 0.5, %v863
    %v865 = vsub.f32 1.5, %v864
    %v866 = vmul.f32 %v861, %v865
    %vm867 = vweird.f32 %v853
    %vm868 = vweird.f32 %v861
    %vm869 = vmor %vm867, %vm868
    %v870 = vsel %vm869, %v861, %v866
    %v871 = vrsqrt.pop %v854
    %v872 = vmul.f32 %v871, %v854
    %v873 = vmul.f32 %v872, %v871
    %v874 = vmul.f32 0.5, %v873
    %v875 = vsub.f32 1.5, %v874
    %v876 = vmul.f32 %v871, %v875
    %vm877 = vweird.f32 %v854
    %vm878 = vweird.f32 %v871
    %vm879 = vmor %vm877, %vm878
    %v880 = vsel %vm879, %v871, %v876
    %v881 = vrsqrt.pop %v855
    %v882 = vmul.f32 %v881, %v855
    %v883 = vmul.f32 %v882, %v881
    %v884 = vmul.f32 0.5, %v883
    %v885 = vsub.f32 1.5, %v884
    %v886 = vmul.f32 %v881, %v885
    %vm887 = vweird.f32 %v855
    %vm888 = vweird.f32 %v881
    %vm889 = vmor %vm887, %vm888
    %v890 = vsel %vm889, %v881, %v886
    %v891 = vrsqrt.pop %v856
    %v892 = vmul.f32 %v891, %v856
    %v893 = vmul.f32 %v892, %v891
    %v894 = vmul.f32 0.5, %v893
    %v895 = vsub.f32 1.5, %v894
    %v896 = vmul.f32 %v891, %v895
    %vm897 = vweird.f32 %v856
    %vm898 = vweird.f32 %v891
    %vm899 = vmor %vm897, %vm898
    %v900 = vsel %vm899, %v891, %v896
    %v901 = vrsqrt.pop %v857
    %v902 = vmul.f32 %v901, %v857
    %v903 = vmul.f32 %v902, %v901
    %v904 = vmul.f32 0.5, %v903
    %v905 = vsub.f32 1.5, %v904
    %v906 = vmul.f32 %v901, %v905
    %vm907 = vweird.f32 %v857
    %vm908 = vweird.f32 %v901
    %vm909 = vmor %vm907, %vm908
    %v910 = vsel %vm909, %v901, %v906
    %v911 = vrsqrt.pop %v858
    %v912 = vmul.f32 %v911, %v858
    %v913 = vmul.f32 %v912, %v911
    %v914 = vmul.f32 0.5, %v913
    %v915 = vsub.f32 1.5, %v914
    %v916 = vmul.f32 %v911, %v915
    %vm917 = vweird.f32 %v858
    %vm918 = vweird.f32 %v911
    %vm919 = vmor %vm917, %vm918
    %v920 = vsel %vm919, %v911, %v916
    %v921 = vrsqrt.pop %v859
    %v922 = vmul.f32 %v921, %v859
    %v923 = vmul.f32 %v922, %v921
    %v924 = vmul.f32 0.5, %v923
    %v925 = vsub.f32 1.5, %v924
    %v926 = vmul.f32 %v921, %v925
    %vm927 = vweird.f32 %v859
    %vm928 = vweird.f32 %v921
    %vm929 = vmor %vm927, %vm928
    %v930 = vsel %vm929, %v921, %v926
    %v931 = vrsqrt.pop %v860
    %v932 = vmul.f32 %v931, %v860
    %v933 = vmul.f32 %v932, %v931
    %v934 = vmul.f32 0.5, %v933
    %v935 = vsub.f32 1.5, %v934
    %v936 = vmul.f32 %v931, %v935
    %vm937 = vweird.f32 %v860
    %vm938 = vweird.f32 %v931
    %vm939 = vmor %vm937, %vm938
    %v940 = vsel %vm939, %v931, %v936
    %v941 = vmul.f32 %v805, %v870
    %v942 = vmul.f32 %v806, %v880
    %v943 = vmul.f32 %v807, %v890
    %v944 = vmul.f32 %v808, %v900
    %v945 = vmul.f32 %v809, %v910
    %v946 = vmul.f32 %v810, %v920
    %v947 = vmul.f32 %v811, %v930
    %v948 = vmul.f32 %v812, %v940
    %v950 = vperm.slane %v771, 0
    %v952 = vmul.f32 %v941, %v950
    %v953 = vmul.f32 %v942, %v950
    %v954 = vmul.f32 %v943, %v950
    %v955 = vmul.f32 %v944, %v950
    %v956 = vmul.f32 %v945, %v950
    %v957 = vmul.f32 %v946, %v950
    %v958 = vmul.f32 %v947, %v950
    %v959 = vmul.f32 %v948, %v950
    %v961 = vperm.slane %v772, 0
    %v963 = vadd.f32 %v952, %v961
    %v964 = vadd.f32 %v953, %v961
    %v965 = vadd.f32 %v954, %v961
    %v966 = vadd.f32 %v955, %v961
    %v967 = vadd.f32 %v956, %v961
    %v968 = vadd.f32 %v957, %v961
    %v969 = vadd.f32 %v958, %v961
    %v970 = vadd.f32 %v959, %v961
    %v971 = vpack.c.bf16 %v964, %v963
    %v972 = vpack.c.bf16 %v966, %v965
    %v973 = vpack.c.bf16 %v968, %v967
    %v974 = vpack.c.bf16 %v970, %v969
    %v975 = vld [vmem:[%s15] sm:$0xf]
    %v976 = vld [vmem:[%s15 + $0x4] sm:$0xf]
    %v977 = vld [vmem:[%s15 + $0x8] sm:$0xf]
    %v978 = vld [vmem:[%s15 + $0xc] sm:$0xf]
    %v979 = vld [vmem:[%s16] sm:$0x1]
    %v981 = vperm.slane %v979, 0
    %v987 = vunpack.c.l.b16 %v975
    %v988 = vunpack.c.l.b16 %v976
    %v989 = vunpack.c.l.b16 %v977
    %v990 = vunpack.c.l.b16 %v978
    %v991 = vpack.c.b16 %v988, %v987
    %v992 = vpack.c.b16 %v990, %v989
    %v996 = vsel %vm80, %v971, 0
    %v999 = vsel %vm80, %v972, 0
    %v1002 = vsel %vm80, %v973, 0
    %v1005 = vsel %vm80, %v974, 0
    %1007 = vmatpush.bf16.msra.mxu0 0
    %1008 = vmatpush.bf16.msra.mxu0 0
    %1009 = vmatpush.bf16.msra.mxu0 0
    %1010 = vmatpush.bf16.msra.mxu0 0
    %1011 = vmatpush.bf16.msra.mxu0 0
    %1012 = vmatpush.bf16.msra.mxu0 0
    %1013 = vmatpush.bf16.msra.mxu0 %v992
    %1014 = vmatpush.bf16.msra.mxu0 %v991
    %1015 = vmatmul.bf16.gmra.mxu0 %v996
    %v1016 = vpop.f32.mrf.mxu0
    %v1017 = vadd.f32 %v981, %v1016
    %v1018 = vpop.f32.mrf.mxu0
    %v1019 = vadd.f32 %v981, %v1018
    %1020 = vmatmul.bf16.gmra.mxu0 %v999
    %v1021 = vpop.f32.mrf.mxu0
    %v1022 = vadd.f32 %v981, %v1021
    %v1023 = vpop.f32.mrf.mxu0
    %v1024 = vadd.f32 %v981, %v1023
    %1025 = vmatmul.bf16.gmra.mxu0 %v1002
    %v1026 = vpop.f32.mrf.mxu0
    %v1027 = vadd.f32 %v981, %v1026
    %v1028 = vpop.f32.mrf.mxu0
    %v1029 = vadd.f32 %v981, %v1028
    %1030 = vmatmul.bf16.gmra.mxu0 %v1005
    %v1031 = vpop.f32.mrf.mxu0
    %v1032 = vadd.f32 %v981, %v1031
    %v1033 = vpop.f32.mrf.mxu0
    %v1034 = vadd.f32 %v981, %v1033
    %1035 = vdwg.mxu0
    %v1036 = vmul.f32 %v1017, %v1017
    %v1037 = vmul.f32 %v1019, %v1019
    %v1038 = vmul.f32 %v1022, %v1022
    %v1039 = vmul.f32 %v1024, %v1024
    %v1040 = vmul.f32 %v1027, %v1027
    %v1041 = vmul.f32 %v1029, %v1029
    %v1042 = vmul.f32 %v1032, %v1032
    %v1043 = vmul.f32 %v1034, %v1034
    %v1044 = vmul.f32 %v1017, %v1036
    %v1045 = vmul.f32 %v1019, %v1037
    %v1046 = vmul.f32 %v1022, %v1038
    %v1047 = vmul.f32 %v1024, %v1039
    %v1048 = vmul.f32 %v1027, %v1040
    %v1049 = vmul.f32 %v1029, %v1041
    %v1050 = vmul.f32 %v1032, %v1042
    %v1051 = vmul.f32 %v1034, %v1043
    %v1052 = vmul.f32 %v1044, 0.044715
    %v1053 = vmul.f32 %v1045, 0.044715
    %v1054 = vmul.f32 %v1046, 0.044715
    %v1055 = vmul.f32 %v1047, 0.044715
    %v1056 = vmul.f32 %v1048, 0.044715
    %v1057 = vmul.f32 %v1049, 0.044715
    %v1058 = vmul.f32 %v1050, 0.044715
    %v1059 = vmul.f32 %v1051, 0.044715
    %v1060 = vadd.f32 %v1017, %v1052
    %v1061 = vadd.f32 %v1019, %v1053
    %v1062 = vadd.f32 %v1022, %v1054
    %v1063 = vadd.f32 %v1024, %v1055
    %v1064 = vadd.f32 %v1027, %v1056
    %v1065 = vadd.f32 %v1029, %v1057
    %v1066 = vadd.f32 %v1032, %v1058
    %v1067 = vadd.f32 %v1034, %v1059
    %v1068 = vmul.f32 %v1060, 0.7978846
    %v1069 = vmul.f32 %v1061, 0.7978846
    %v1070 = vmul.f32 %v1062, 0.7978846
    %v1071 = vmul.f32 %v1063, 0.7978846
    %v1072 = vmul.f32 %v1064, 0.7978846
    %v1073 = vmul.f32 %v1065, 0.7978846
    %v1074 = vmul.f32 %v1066, 0.7978846
    %v1075 = vmul.f32 %v1067, 0.7978846
    %v1076 = vtanh.pop %v1068
    %v1077 = vtanh.pop %v1069
    %v1078 = vtanh.pop %v1070
    %v1079 = vtanh.pop %v1071
    %v1080 = vtanh.pop %v1072
    %v1081 = vtanh.pop %v1073
    %v1082 = vtanh.pop %v1074
    %v1083 = vtanh.pop %v1075
    %v1084 = vadd.f32 %v1076, 1.0
    %v1085 = vadd.f32 %v1077, 1.0
    %v1086 = vadd.f32 %v1078, 1.0
    %v1087 = vadd.f32 %v1079, 1.0
    %v1088 = vadd.f32 %v1080, 1.0
    %v1089 = vadd.f32 %v1081, 1.0
    %v1090 = vadd.f32 %v1082, 1.0
    %v1091 = vadd.f32 %v1083, 1.0
    %v1092 = vmul.f32 %v1084, 0.5
    %v1093 = vmul.f32 %v1085, 0.5
    %v1094 = vmul.f32 %v1086, 0.5
    %v1095 = vmul.f32 %v1087, 0.5
    %v1096 = vmul.f32 %v1088, 0.5
    %v1097 = vmul.f32 %v1089, 0.5
    %v1098 = vmul.f32 %v1090, 0.5
    %v1099 = vmul.f32 %v1091, 0.5
    %v1100 = vmul.f32 %v1017, %v1092
    %v1101 = vmul.f32 %v1019, %v1093
    %v1102 = vmul.f32 %v1022, %v1094
    %v1103 = vmul.f32 %v1024, %v1095
    %v1104 = vmul.f32 %v1027, %v1096
    %v1105 = vmul.f32 %v1029, %v1097
    %v1106 = vmul.f32 %v1032, %v1098
    %v1107 = vmul.f32 %v1034, %v1099
    %v1108 = vpack.c.bf16 %v1101, %v1100
    %v1109 = vpack.c.bf16 %v1103, %v1102
    %v1110 = vpack.c.bf16 %v1105, %v1104
    %v1111 = vpack.c.bf16 %v1107, %v1106
    %v1112 = vld [vmem:[%s17] sm:$0xf]
    %v1113 = vld [vmem:[%s17 + $0x4] sm:$0xf]
    %v1114 = vld [vmem:[%s17 + $0x8] sm:$0xf]
    %v1115 = vld [vmem:[%s17 + $0xc] sm:$0xf]
    %v1116 = vld [vmem:[%s17 + $0x10] sm:$0xf]
    %v1117 = vld [vmem:[%s17 + $0x14] sm:$0xf]
    %v1118 = vld [vmem:[%s17 + $0x18] sm:$0xf]
    %v1119 = vld [vmem:[%s17 + $0x1c] sm:$0xf]
    %v1120 = vld [vmem:[%s17 + $0x20] sm:$0xf]
    %v1121 = vld [vmem:[%s17 + $0x24] sm:$0xf]
    %v1122 = vld [vmem:[%s17 + $0x28] sm:$0xf]
    %v1123 = vld [vmem:[%s17 + $0x2c] sm:$0xf]
    %v1124 = vld [vmem:[%s17 + $0x30] sm:$0xf]
    %v1125 = vld [vmem:[%s17 + $0x34] sm:$0xf]
    %v1126 = vld [vmem:[%s17 + $0x38] sm:$0xf]
    %v1127 = vld [vmem:[%s17 + $0x3c] sm:$0xf]
    %v1128 = vld [vmem:[%s18] sm:$0x1]
    %v1130 = vperm.slane %v1128, 0
    %v1148 = vunpack.c.l.b16 %v1112
    %v1149 = vunpack.c.l.b16 %v1113
    %v1150 = vunpack.c.l.b16 %v1114
    %v1151 = vunpack.c.l.b16 %v1115
    %v1152 = vunpack.c.l.b16 %v1116
    %v1153 = vunpack.c.l.b16 %v1117
    %v1154 = vunpack.c.l.b16 %v1118
    %v1155 = vunpack.c.l.b16 %v1119
    %v1156 = vunpack.c.l.b16 %v1120
    %v1157 = vunpack.c.l.b16 %v1121
    %v1158 = vunpack.c.l.b16 %v1122
    %v1159 = vunpack.c.l.b16 %v1123
    %v1160 = vunpack.c.l.b16 %v1124
    %v1161 = vunpack.c.l.b16 %v1125
    %v1162 = vunpack.c.l.b16 %v1126
    %v1163 = vunpack.c.l.b16 %v1127
    %v1164 = vpack.c.b16 %v1149, %v1148
    %v1165 = vpack.c.b16 %v1151, %v1150
    %v1166 = vpack.c.b16 %v1153, %v1152
    %v1167 = vpack.c.b16 %v1155, %v1154
    %v1168 = vpack.c.b16 %v1157, %v1156
    %v1169 = vpack.c.b16 %v1159, %v1158
    %v1170 = vpack.c.b16 %v1161, %v1160
    %v1171 = vpack.c.b16 %v1163, %v1162
    %1180 = vmatpush.bf16.msra.mxu0 %v1171
    %1181 = vmatpush.bf16.msra.mxu0 %v1170
    %1182 = vmatpush.bf16.msra.mxu0 %v1169
    %1183 = vmatpush.bf16.msra.mxu0 %v1168
    %1184 = vmatpush.bf16.msra.mxu0 %v1167
    %1185 = vmatpush.bf16.msra.mxu0 %v1166
    %1186 = vmatpush.bf16.msra.mxu0 %v1165
    %1187 = vmatpush.bf16.msra.mxu0 %v1164
    %1188 = vmatmul.bf16.gmra.mxu0 %v1108
    %v1189 = vpop.f32.mrf.mxu0
    %v1190 = vadd.f32 %v1130, %v1189
    %v1191 = vpop.f32.mrf.mxu0
    %v1192 = vadd.f32 %v1130, %v1191
    %1193 = vmatmul.bf16.gmra.mxu0 %v1109
    %v1194 = vpop.f32.mrf.mxu0
    %v1195 = vadd.f32 %v1130, %v1194
    %v1196 = vpop.f32.mrf.mxu0
    %v1197 = vadd.f32 %v1130, %v1196
    %1198 = vmatmul.bf16.gmra.mxu0 %v1110
    %v1199 = vpop.f32.mrf.mxu0
    %v1200 = vadd.f32 %v1130, %v1199
    %v1201 = vpop.f32.mrf.mxu0
    %v1202 = vadd.f32 %v1130, %v1201
    %1203 = vmatmul.bf16.gmra.mxu0 %v1111
    %v1204 = vpop.f32.mrf.mxu0
    %v1205 = vadd.f32 %v1130, %v1204
    %v1206 = vpop.f32.mrf.mxu0
    %v1207 = vadd.f32 %v1130, %v1206
    %1208 = vdwg.mxu0
    %v1209 = vadd.f32 %v763, %v1190
    %v1210 = vadd.f32 %v764, %v1192
    %v1211 = vadd.f32 %v765, %v1195
    %v1212 = vadd.f32 %v766, %v1197
    %v1213 = vadd.f32 %v767, %v1200
    %v1214 = vadd.f32 %v768, %v1202
    %v1215 = vadd.f32 %v769, %v1205
    %v1216 = vadd.f32 %v770, %v1207
    %v1217 = vpack.c.bf16 %v1210, %v1209
    %v1218 = vpack.c.bf16 %v1212, %v1211
    %v1219 = vpack.c.bf16 %v1214, %v1213
    %v1220 = vpack.c.bf16 %v1216, %v1215
    %v1221 = vld [vmem:[%s19] sm:$0xf]
    %v1222 = vld [vmem:[%s19 + $0x4] sm:$0xf]
    %v1223 = vld [vmem:[%s19 + $0x8] sm:$0xf]
    %v1224 = vld [vmem:[%s19 + $0xc] sm:$0xf]
    %v1225 = vld [vmem:[%s20] sm:$0x1]
    %v1227 = vperm.slane %v1225, 0
    %v1233 = vunpack.c.l.b16 %v1221
    %v1234 = vunpack.c.l.b16 %v1222
    %v1235 = vunpack.c.l.b16 %v1223
    %v1236 = vunpack.c.l.b16 %v1224
    %v1237 = vpack.c.b16 %v1234, %v1233
    %v1238 = vpack.c.b16 %v1236, %v1235
    %v1242 = vsel %vm80, %v1217, 0
    %v1245 = vsel %vm80, %v1218, 0
    %v1248 = vsel %vm80, %v1219, 0
    %v1251 = vsel %vm80, %v1220, 0
    %1253 = vmatpush.bf16.msra.mxu0 0
    %1254 = vmatpush.bf16.msra.mxu0 0
    %1255 = vmatpush.bf16.msra.mxu0 0
    %1256 = vmatpush.bf16.msra.mxu0 0
    %1257 = vmatpush.bf16.msra.mxu0 0
    %1258 = vmatpush.bf16.msra.mxu0 0
    %1259 = vmatpush.bf16.msra.mxu0 %v1238
    %1260 = vmatpush.bf16.msra.mxu0 %v1237
    %1261 = vmatmul.bf16.gmra.mxu0 %v1242
    %v1262 = vpop.f32.mrf.mxu0
    %v1263 = vadd.f32 %v1227, %v1262
    %v1264 = vpop.f32.mrf.mxu0
    %v1265 = vadd.f32 %v1227, %v1264
    %1266 = vmatmul.bf16.gmra.mxu0 %v1245
    %v1267 = vpop.f32.mrf.mxu0
    %v1268 = vadd.f32 %v1227, %v1267
    %v1269 = vpop.f32.mrf.mxu0
    %v1270 = vadd.f32 %v1227, %v1269
    %1271 = vmatmul.bf16.gmra.mxu0 %v1248
    %v1272 = vpop.f32.mrf.mxu0
    %v1273 = vadd.f32 %v1227, %v1272
    %v1274 = vpop.f32.mrf.mxu0
    %v1275 = vadd.f32 %v1227, %v1274
    %1276 = vmatmul.bf16.gmra.mxu0 %v1251
    %v1277 = vpop.f32.mrf.mxu0
    %v1278 = vadd.f32 %v1227, %v1277
    %v1279 = vpop.f32.mrf.mxu0
    %v1280 = vadd.f32 %v1227, %v1279
    %1281 = vdwg.mxu0
    %1282 = vst [vmem:[#allocation2] sm:$0xff] %v1263
    %1283 = vst [vmem:[#allocation2 + $0x8] sm:$0xff] %v1265
    %1284 = vst [vmem:[#allocation2 + $0x10] sm:$0xff] %v1268
    %1285 = vst [vmem:[#allocation2 + $0x18] sm:$0xff] %v1270
    %1286 = vst [vmem:[#allocation2 + $0x20] sm:$0xff] %v1273
    %1287 = vst [vmem:[#allocation2 + $0x28] sm:$0xff] %v1275
    %1288 = vst [vmem:[#allocation2 + $0x30] sm:$0xff] %v1278
    %1289 = vst [vmem:[#allocation2 + $0x38] sm:$0xff] %v1280
    // Predicated region
    $region86: #{tpu_custom_call.1} parent=1 // pred_check
      _
    $region87: #{tpu_custom_call.1} parent=1 // pred_check_branch
      %1291 = sbr.rel (0) target = $region89
    $region88: #{tpu_custom_call.1} parent=1 // pred_region
      %1293 = vsyncadd [#allocation3], 0
      %s1294 = sshll.u32 [#allocation2], 4
      %s1295 = int_to_ptr.vmem [resolvable:$true] %s1294
      %s1296 = sshll.u32 %s21, 4
      %s1297 = int_to_ptr.hbm [resolvable:$true] %s1296
      %1302 = dma.vmem_to_hbm [thread:$0]  %s1295, 1024, %s1297, [#allocation3], 128, 128, 8
    $region89: #{tpu_custom_call.1} parent=1 // pred_fallthru
      _
    // Predicated region
    $region90: #{tpu_custom_call.1} parent=1 // pred_check
      _
    $region91: #{tpu_custom_call.1} parent=1 // pred_check_branch
      %1304 = sbr.rel (0) target = $region93
    $region92: #{tpu_custom_call.1} parent=1 // pred_region
      %1306 = dma.done [#allocation3], 1024
    $region93: #{tpu_custom_call.1} parent=1 // pred_fallthru
      _
    %1307 = vsyncpa [#allocation3], 1

</llo_original>
